<compile_context>
chip_gen: v6e
topology: v6e:2x2x1
jax: 0.10.0
libtpu: 0.0.40
codegen_flags: <defaults>
</compile_context>

<pallas_src>
import jax
import jax.numpy as jnp
from jax.experimental import pallas as pl
from jax.experimental.pallas import tpu as pltpu

LN_EPS = 1e-5  # PyTorch nn.LayerNorm default


def _layernorm(x, gamma, beta):
    # Two data-independent lane reductions (overlap on XLU); var = E[x^2] - mean^2.
    inv_n = 1.0 / x.shape[-1]
    mean = jnp.sum(x, axis=-1, keepdims=True) * inv_n
    mean_sq = jnp.sum(x * x, axis=-1, keepdims=True) * inv_n
    var = jnp.maximum(mean_sq - mean * mean, 0.0)
    return (x - mean) * jax.lax.rsqrt(var + LN_EPS) * gamma + beta


def critic_kernel(
    obs_ref,            # (tb, D_obs) f32
    act_ref,            # (tb, D_act) f32
    w1o_ref, w1a_ref,   # (D_obs, F1) f32, (D_act, F1) f32
    p1_ref,             # (3, F1) f32 : rows [b1, ln1_gamma, ln1_beta]
    w2_ref,             # (F1, F2) bf16
    p2_ref,             # (5, F2) f32 : rows [b2, ln2_gamma, ln2_beta, wq, bq@[4,0]]
    out_ref,            # (1, tb) f32  -- lane-dense q row for this tile
):
    # fc1 split across (obs, actions): obs @ W1o + act @ W1a + b1 == concat @ W1.
    # K is tiny (24 / 12) so keep the operands in f32 (accuracy, zero MXU cost).
    h1 = (
        jnp.dot(obs_ref[...], w1o_ref[...], preferred_element_type=jnp.float32)
        + jnp.dot(act_ref[...], w1a_ref[...], preferred_element_type=jnp.float32)
        + p1_ref[0:1, :]
    )
    h1 = jnp.maximum(_layernorm(h1, p1_ref[1:2, :], p1_ref[2:3, :]), 0.0)

    # fc2: bf16 operands on the MXU, f32 accumulation; LN/ReLU stay f32 (v5e-safe).
    h2 = (
        jnp.dot(h1.astype(jnp.bfloat16), w2_ref[...],
                preferred_element_type=jnp.float32)
        + p2_ref[0:1, :]
    )
    h2 = jnp.maximum(_layernorm(h2, p2_ref[1:2, :], p2_ref[2:3, :]), 0.0)

    # q head: contract wq (1, F2) with h2 (tb, F2) over F2 ("NT" matmul, the
    # flash-attention Q@K^T form) -> (1, tb) lane-dense row; add bq scalar.
    q_row = jax.lax.dot_general(
        p2_ref[3:4, :], h2,
        dimension_numbers=(((1,), (1,)), ((), ())),
        preferred_element_type=jnp.float32,
    )
    out_ref[...] = (q_row + p2_ref[4:5, 0:1]).astype(out_ref.dtype)


def _pick_batch_tile(batch):
    # Big tiles amortize per-step overhead; VMEM footprint even at tb=4096 is a
    # few MB (far under every generation's limit).  Cap at B//2 for large B so
    # the parallel grid axis has >= 2 steps (v7x dual-TC sharding).
    cap = batch // 2 if batch >= 2048 else batch
    for tb in (4096, 2048, 1024, 512, 256, 128, 64, 32, 16, 8):
        if tb <= cap and batch % tb == 0:
            return tb
    return batch  # small / odd batch: single full-batch block


@jax.jit
def critic_forward(obs, actions, params):
    B, d_obs = obs.shape
    _, d_act = actions.shape
    tb = _pick_batch_tile(B)
    grid = (B // tb,)

    weight_args = (params["w1_obs"], params["w1_act"], params["p1"],
                   params["w2"], params["p2"])
    # Constant index_maps: weights/params DMA'd once, VMEM-resident across tiles.
    resident = lambda a: pl.BlockSpec(a.shape, lambda i: (0, 0))

    in_specs = [
        pl.BlockSpec((tb, d_obs), lambda i: (i, 0)),
        pl.BlockSpec((tb, d_act), lambda i: (i, 0)),
    ] + [resident(a) for a in weight_args]

    q_row = pl.pallas_call(
        critic_kernel,
        out_shape=jax.ShapeDtypeStruct((1, B), jnp.float32),
        grid_spec=pltpu.PrefetchScalarGridSpec(
            num_scalar_prefetch=0,
            grid=grid,
            in_specs=in_specs,
            out_specs=pl.BlockSpec((1, tb), lambda i: (0, i)),
        ),
        compiler_params=pltpu.CompilerParams(
            # Parallel batch axis: pipelined input DMAs; dual-TC sharding on v7x
            # whenever the grid has >= 2 steps.
            dimension_semantics=("parallel",),
        ),
    )(obs, actions, *weight_args)

    # (1, B) -> (B, 1): identical linear order, free reshape outside the kernel.
    return q_row.reshape(B, 1)


def init_params(key, obs_len, n_actions, n_agents, fc1_dims, fc2_dims):
    """Deterministic init mirroring the PyTorch module's shapes and bounds."""
    d_obs = obs_len * n_agents
    d_act = n_actions * n_agents
    ks = jax.random.split(key, 7)

    # PyTorch code uses 1/sqrt(weight.size(0)) == 1/sqrt(out_features).
    f1 = float(fc1_dims) ** -0.5
    f2 = float(fc2_dims) ** -0.5
    f3 = 0.003
    u = lambda k, shape, b: jax.random.uniform(k, shape, jnp.float32, -b, b)

    b1 = u(ks[2], (fc1_dims,), f1)
    p1 = jnp.stack([b1,
                    jnp.ones((fc1_dims,), jnp.float32),    # LN1 gamma
                    jnp.zeros((fc1_dims,), jnp.float32)])  # LN1 beta

    b2 = u(ks[4], (fc2_dims,), f2)
    wq = u(ks[5], (fc2_dims,), f3)
    bq = u(ks[6], (), f3)
    bq_row = jnp.zeros((fc2_dims,), jnp.float32).at[0].set(bq)
    p2 = jnp.stack([b2,
                    jnp.ones((fc2_dims,), jnp.float32),    # LN2 gamma
                    jnp.zeros((fc2_dims,), jnp.float32),   # LN2 beta
                    wq, bq_row])

    return {
        # fc1 weight stored (in, out), pre-split into obs/action halves, kept f32.
        "w1_obs": u(ks[0], (d_obs, fc1_dims), f1),
        "w1_act": u(ks[1], (d_act, fc1_dims), f1),
        "p1": p1,                                              # (3, F1) f32
        "w2": u(ks[3], (fc1_dims, fc2_dims), f2).astype(jnp.bfloat16),
        "p2": p2,                                              # (5, F2) f32
    }


def _reference(obs, actions, params):
    # Pure-JAX f32 reference with the canonical (centered) LayerNorm.
    def ln(x, g, b):
        m = jnp.mean(x, axis=-1, keepdims=True)
        c = x - m
        v = jnp.mean(c * c, axis=-1, keepdims=True)
        return c * jax.lax.rsqrt(v + LN_EPS) * g + b

    b1, g1, be1 = params["p1"]
    b2, g2, be2, wq, bq_row = params["p2"]
    w1 = jnp.concatenate([params["w1_obs"], params["w1_act"]], axis=0)
    x = jnp.concatenate([obs, actions], axis=1)
    h1 = jnp.maximum(ln(x @ w1 + b1, g1, be1), 0.0)
    h2 = h1 @ params["w2"].astype(jnp.float32) + b2
    h2 = jnp.maximum(ln(h2, g2, be2), 0.0)
    return jnp.sum(h2 * wq, axis=-1, keepdims=True) + bq_row[0]


if __name__ == "__main__":
    # Shapes consistent with the module's constructor; hidden dims are multiples
    # of 128 (lane-dense vregs / MXU columns).  batch=384 -> 3 tiles of 128, so
    # the multi-tile pipelined path is exercised.
    obs_len, n_actions, n_agents = 8, 4, 3
    fc1_dims, fc2_dims = 128, 128
    batch = 384

    key = jax.random.PRNGKey(0)
    k_obs, k_act, k_par = jax.random.split(key, 3)

    obs = jax.random.normal(k_obs, (batch, obs_len * n_agents), jnp.float32)
    actions = jax.random.normal(k_act, (batch, n_actions * n_agents), jnp.float32)
    params = init_params(k_par, obs_len, n_actions, n_agents, fc1_dims, fc2_dims)

    q = jax.block_until_ready(critic_forward(obs, actions, params))
    ref = _reference(obs, actions, params)

    assert q.shape == (batch, 1)
    # Only fc2's activations are cast to bf16 (weights identical in both paths);
    # fc1 / LN / q-head are f32 -> tight tolerance vs. the f32 reference.
    max_err = float(jnp.max(jnp.abs(q - ref)))
    assert jnp.allclose(q, ref, atol=3e-3, rtol=3e-2), max_err

    print("KERNEL_OK")
</pallas_src>

<mosaic_0001>
module attributes {stable_mosaic.version = 11 : i64} {
  func.func @critic_kernel(%arg0: i32, %arg1: memref<128x24xf32, #tpu.memory_space<vmem>>, %arg2: memref<128x12xf32, #tpu.memory_space<vmem>>, %arg3: memref<24x128xf32, #tpu.memory_space<vmem>>, %arg4: memref<12x128xf32, #tpu.memory_space<vmem>>, %arg5: memref<3x128xf32, #tpu.memory_space<vmem>>, %arg6: memref<128x128xbf16, #tpu.memory_space<vmem>>, %arg7: memref<5x128xf32, #tpu.memory_space<vmem>>, %arg8: memref<1x128xf32, #tpu.memory_space<vmem>>) attributes {dimension_semantics = [#tpu.dimension_semantics<parallel>], iteration_bounds = array<i64: 3>, scalar_prefetch = 0 : i64, scratch_operands = 0 : i64, tpu.core_type = #tpu.core_type<tc>, window_params = [{transform_indices = @transform_0, window_bounds = array<i64: 128, 24>}, {transform_indices = @transform_1, window_bounds = array<i64: 128, 12>}, {pipeline_mode = #tpu.pipeline_mode<synchronous>, transform_indices = @transform_2, window_bounds = array<i64: 24, 128>}, {pipeline_mode = #tpu.pipeline_mode<synchronous>, transform_indices = @transform_3, window_bounds = array<i64: 12, 128>}, {pipeline_mode = #tpu.pipeline_mode<synchronous>, transform_indices = @transform_4, window_bounds = array<i64: 3, 128>}, {pipeline_mode = #tpu.pipeline_mode<synchronous>, transform_indices = @transform_5, window_bounds = array<i64: 128, 128>}, {pipeline_mode = #tpu.pipeline_mode<synchronous>, transform_indices = @transform_6, window_bounds = array<i64: 5, 128>}, {transform_indices = @transform_7, window_bounds = array<i64: 1, 128>}]} {
    %c0 = arith.constant 0 : index
    %c0_0 = arith.constant 0 : index
    %0 = vector.load %arg1[%c0, %c0_0] : memref<128x24xf32, #tpu.memory_space<vmem>>, vector<128x24xf32>
    %c0_1 = arith.constant 0 : index
    %c0_2 = arith.constant 0 : index
    %1 = vector.load %arg3[%c0_1, %c0_2] : memref<24x128xf32, #tpu.memory_space<vmem>>, vector<24x128xf32>
    %cst = arith.constant dense<0.000000e+00> : vector<128x128xf32>
    %2 = tpu.matmul %0, %1, %cst {dimension_numbers = #tpu.dot_dimension_numbers<[1], [0], [0], [1], [0, 0, 1, 1], [], []>} : vector<128x24xf32>, vector<24x128xf32>, vector<128x128xf32> -> vector<128x128xf32>
    %c0_3 = arith.constant 0 : index
    %c0_4 = arith.constant 0 : index
    %3 = vector.load %arg2[%c0_3, %c0_4] : memref<128x12xf32, #tpu.memory_space<vmem>>, vector<128x12xf32>
    %c0_5 = arith.constant 0 : index
    %c0_6 = arith.constant 0 : index
    %4 = vector.load %arg4[%c0_5, %c0_6] : memref<12x128xf32, #tpu.memory_space<vmem>>, vector<12x128xf32>
    %cst_7 = arith.constant dense<0.000000e+00> : vector<128x128xf32>
    %5 = tpu.matmul %3, %4, %cst_7 {dimension_numbers = #tpu.dot_dimension_numbers<[1], [0], [0], [1], [0, 0, 1, 1], [], []>} : vector<128x12xf32>, vector<12x128xf32>, vector<128x128xf32> -> vector<128x128xf32>
    %6 = arith.addf %2, %5 : vector<128x128xf32>
    %c0_8 = arith.constant 0 : index
    %c0_9 = arith.constant 0 : index
    %7 = vector.load %arg5[%c0_8, %c0_9] : memref<3x128xf32, #tpu.memory_space<vmem>>, vector<1x128xf32>
    %8 = vector.broadcast %7 : vector<1x128xf32> to vector<128x128xf32>
    %9 = arith.addf %6, %8 : vector<128x128xf32>
    %c1 = arith.constant 1 : index
    %c0_10 = arith.constant 0 : index
    %10 = vector.load %arg5[%c1, %c0_10] : memref<3x128xf32, #tpu.memory_space<vmem>>, vector<1x128xf32>
    %c2 = arith.constant 2 : index
    %c0_11 = arith.constant 0 : index
    %11 = vector.load %arg5[%c2, %c0_11] : memref<3x128xf32, #tpu.memory_space<vmem>>, vector<1x128xf32>
    %cst_12 = arith.constant dense<0.000000e+00> : vector<128xf32>
    %12 = vector.multi_reduction <add>, %9, %cst_12 [1] : vector<128x128xf32> to vector<128xf32>
    %13 = vector.shape_cast %12 : vector<128xf32> to vector<128x1xf32>
    %cst_13 = arith.constant 7.812500e-03 : f32
    %14 = vector.broadcast %cst_13 : f32 to vector<128x1xf32>
    %15 = arith.mulf %13, %14 : vector<128x1xf32>
    %16 = arith.mulf %9, %9 : vector<128x128xf32>
    %cst_14 = arith.constant dense<0.000000e+00> : vector<128xf32>
    %17 = vector.multi_reduction <add>, %16, %cst_14 [1] : vector<128x128xf32> to vector<128xf32>
    %18 = vector.shape_cast %17 : vector<128xf32> to vector<128x1xf32>
    %cst_15 = arith.constant 7.812500e-03 : f32
    %19 = vector.broadcast %cst_15 : f32 to vector<128x1xf32>
    %20 = arith.mulf %18, %19 : vector<128x1xf32>
    %21 = arith.mulf %15, %15 : vector<128x1xf32>
    %22 = arith.subf %20, %21 : vector<128x1xf32>
    %cst_16 = arith.constant 0.000000e+00 : f32
    %23 = vector.broadcast %cst_16 : f32 to vector<128x1xf32>
    %24 = arith.maximumf %22, %23 : vector<128x1xf32>
    %25 = vector.broadcast %15 : vector<128x1xf32> to vector<128x128xf32>
    %26 = arith.subf %9, %25 : vector<128x128xf32>
    %cst_17 = arith.constant 9.99999974E-6 : f32
    %27 = vector.broadcast %cst_17 : f32 to vector<128x1xf32>
    %28 = arith.addf %24, %27 : vector<128x1xf32>
    %29 = math.rsqrt %28 : vector<128x1xf32>
    %30 = vector.broadcast %29 : vector<128x1xf32> to vector<128x128xf32>
    %31 = arith.mulf %26, %30 : vector<128x128xf32>
    %32 = vector.broadcast %10 : vector<1x128xf32> to vector<128x128xf32>
    %33 = arith.mulf %31, %32 : vector<128x128xf32>
    %34 = vector.broadcast %11 : vector<1x128xf32> to vector<128x128xf32>
    %35 = arith.addf %33, %34 : vector<128x128xf32>
    %cst_18 = arith.constant 0.000000e+00 : f32
    %36 = vector.broadcast %cst_18 : f32 to vector<128x128xf32>
    %37 = arith.maximumf %35, %36 : vector<128x128xf32>
    %38 = arith.truncf %37 : vector<128x128xf32> to vector<128x128xbf16>
    %c0_19 = arith.constant 0 : index
    %c0_20 = arith.constant 0 : index
    %39 = vector.load %arg6[%c0_19, %c0_20] : memref<128x128xbf16, #tpu.memory_space<vmem>>, vector<128x128xbf16>
    %cst_21 = arith.constant dense<0.000000e+00> : vector<128x128xf32>
    %40 = tpu.matmul %38, %39, %cst_21 {dimension_numbers = #tpu.dot_dimension_numbers<[1], [0], [0], [1], [0, 0, 1, 1], [], []>} : vector<128x128xbf16>, vector<128x128xbf16>, vector<128x128xf32> -> vector<128x128xf32>
    %c0_22 = arith.constant 0 : index
    %c0_23 = arith.constant 0 : index
    %41 = vector.load %arg7[%c0_22, %c0_23] : memref<5x128xf32, #tpu.memory_space<vmem>>, vector<1x128xf32>
    %42 = vector.broadcast %41 : vector<1x128xf32> to vector<128x128xf32>
    %43 = arith.addf %40, %42 : vector<128x128xf32>
    %c1_24 = arith.constant 1 : index
    %c0_25 = arith.constant 0 : index
    %44 = vector.load %arg7[%c1_24, %c0_25] : memref<5x128xf32, #tpu.memory_space<vmem>>, vector<1x128xf32>
    %c2_26 = arith.constant 2 : index
    %c0_27 = arith.constant 0 : index
    %45 = vector.load %arg7[%c2_26, %c0_27] : memref<5x128xf32, #tpu.memory_space<vmem>>, vector<1x128xf32>
    %cst_28 = arith.constant dense<0.000000e+00> : vector<128xf32>
    %46 = vector.multi_reduction <add>, %43, %cst_28 [1] : vector<128x128xf32> to vector<128xf32>
    %47 = vector.shape_cast %46 : vector<128xf32> to vector<128x1xf32>
    %cst_29 = arith.constant 7.812500e-03 : f32
    %48 = vector.broadcast %cst_29 : f32 to vector<128x1xf32>
    %49 = arith.mulf %47, %48 : vector<128x1xf32>
    %50 = arith.mulf %43, %43 : vector<128x128xf32>
    %cst_30 = arith.constant dense<0.000000e+00> : vector<128xf32>
    %51 = vector.multi_reduction <add>, %50, %cst_30 [1] : vector<128x128xf32> to vector<128xf32>
    %52 = vector.shape_cast %51 : vector<128xf32> to vector<128x1xf32>
    %cst_31 = arith.constant 7.812500e-03 : f32
    %53 = vector.broadcast %cst_31 : f32 to vector<128x1xf32>
    %54 = arith.mulf %52, %53 : vector<128x1xf32>
    %55 = arith.mulf %49, %49 : vector<128x1xf32>
    %56 = arith.subf %54, %55 : vector<128x1xf32>
    %cst_32 = arith.constant 0.000000e+00 : f32
    %57 = vector.broadcast %cst_32 : f32 to vector<128x1xf32>
    %58 = arith.maximumf %56, %57 : vector<128x1xf32>
    %59 = vector.broadcast %49 : vector<128x1xf32> to vector<128x128xf32>
    %60 = arith.subf %43, %59 : vector<128x128xf32>
    %cst_33 = arith.constant 9.99999974E-6 : f32
    %61 = vector.broadcast %cst_33 : f32 to vector<128x1xf32>
    %62 = arith.addf %58, %61 : vector<128x1xf32>
    %63 = math.rsqrt %62 : vector<128x1xf32>
    %64 = vector.broadcast %63 : vector<128x1xf32> to vector<128x128xf32>
    %65 = arith.mulf %60, %64 : vector<128x128xf32>
    %66 = vector.broadcast %44 : vector<1x128xf32> to vector<128x128xf32>
    %67 = arith.mulf %65, %66 : vector<128x128xf32>
    %68 = vector.broadcast %45 : vector<1x128xf32> to vector<128x128xf32>
    %69 = arith.addf %67, %68 : vector<128x128xf32>
    %cst_34 = arith.constant 0.000000e+00 : f32
    %70 = vector.broadcast %cst_34 : f32 to vector<128x128xf32>
    %71 = arith.maximumf %69, %70 : vector<128x128xf32>
    %c3 = arith.constant 3 : index
    %c0_35 = arith.constant 0 : index
    %72 = vector.load %arg7[%c3, %c0_35] : memref<5x128xf32, #tpu.memory_space<vmem>>, vector<1x128xf32>
    %cst_36 = arith.constant dense<0.000000e+00> : vector<1x128xf32>
    %73 = tpu.matmul %72, %71, %cst_36 {dimension_numbers = #tpu.dot_dimension_numbers<[1], [1], [0], [0], [0, 0, 1, 0], [], []>} : vector<1x128xf32>, vector<128x128xf32>, vector<1x128xf32> -> vector<1x128xf32>
    %c4 = arith.constant 4 : index
    %c0_37 = arith.constant 0 : index
    %74 = vector.load %arg7[%c4, %c0_37] : memref<5x128xf32, #tpu.memory_space<vmem>>, vector<1x1xf32>
    %75 = vector.broadcast %74 : vector<1x1xf32> to vector<1x128xf32>
    %76 = arith.addf %73, %75 : vector<1x128xf32>
    %c0_38 = arith.constant 0 : index
    %c0_39 = arith.constant 0 : index
    %77 = vector.load %arg8[%c0_38, %c0_39] : memref<1x128xf32, #tpu.memory_space<vmem>>, vector<1x128xf32>
    tpu.vector_store %arg8[%c0_38, %c0_39], %76 {strides = array<i32>} : memref<1x128xf32, #tpu.memory_space<vmem>>, vector<1x128xf32>,
    return
  }
  func.func @transform_0(%arg0: i32) -> (i32, i32) {
    %c0_i32 = arith.constant 0 : i32
    %c0_i32_0 = arith.constant 0 : i32
    return %arg0, %c0_i32 : i32, i32
  }
  func.func @transform_1(%arg0: i32) -> (i32, i32) {
    %c0_i32 = arith.constant 0 : i32
    %c0_i32_0 = arith.constant 0 : i32
    return %arg0, %c0_i32 : i32, i32
  }
  func.func @transform_2(%arg0: i32) -> (i32, i32) {
    %c0_i32 = arith.constant 0 : i32
    %c0_i32_0 = arith.constant 0 : i32
    %c0_i32_1 = arith.constant 0 : i32
    return %c0_i32, %c0_i32_0 : i32, i32
  }
  func.func @transform_3(%arg0: i32) -> (i32, i32) {
    %c0_i32 = arith.constant 0 : i32
    %c0_i32_0 = arith.constant 0 : i32
    %c0_i32_1 = arith.constant 0 : i32
    return %c0_i32, %c0_i32_0 : i32, i32
  }
  func.func @transform_4(%arg0: i32) -> (i32, i32) {
    %c0_i32 = arith.constant 0 : i32
    %c0_i32_0 = arith.constant 0 : i32
    %c0_i32_1 = arith.constant 0 : i32
    return %c0_i32, %c0_i32_0 : i32, i32
  }
  func.func @transform_5(%arg0: i32) -> (i32, i32) {
    %c0_i32 = arith.constant 0 : i32
    %c0_i32_0 = arith.constant 0 : i32
    %c0_i32_1 = arith.constant 0 : i32
    return %c0_i32, %c0_i32_0 : i32, i32
  }
  func.func @transform_6(%arg0: i32) -> (i32, i32) {
    %c0_i32 = arith.constant 0 : i32
    %c0_i32_0 = arith.constant 0 : i32
    %c0_i32_1 = arith.constant 0 : i32
    return %c0_i32, %c0_i32_0 : i32, i32
  }
  func.func @transform_7(%arg0: i32) -> (i32, i32) {
    %c0_i32 = arith.constant 0 : i32
    %c0_i32_0 = arith.constant 0 : i32
    return %c0_i32, %arg0 : i32, i32
  }
}

</mosaic_0001>

<llo_original>
// kernel: critic_forward.1
$region0: #{critic_forward.1}
  #allocation0 [shape = 'u32[]', space=smem, size = 0x4, offset = 0x4, fixed_abs, tag = 'smem constant byte address 0x4 - core index']
  #allocation1 [shape = 'u32[144,128]{1,0:T(1,128)}', space=vmem, size = 0x12000, scoped, tag = 'internal scratch']
  %s0 = inlined_call_operand.vmem [shape: f32[384,24], index: 0, kind: input, shape index: {}]
  %s1 = inlined_call_operand.vmem [shape: f32[384,12], index: 1, kind: input, shape index: {}]
  %s2 = inlined_call_operand.vmem [shape: f32[24,128], index: 2, kind: input, shape index: {}]
  %s3 = inlined_call_operand.vmem [shape: f32[12,128], index: 3, kind: input, shape index: {}]
  %s4 = inlined_call_operand.vmem [shape: f32[3,128], index: 4, kind: input, shape index: {}]
  %s5 = inlined_call_operand.vmem [shape: bf16[128,128], index: 5, kind: input, shape index: {}]
  %s6 = inlined_call_operand.vmem [shape: f32[5,128], index: 6, kind: input, shape index: {}]
  %s7 = inlined_call_operand.hbm [shape: f32[1,384], index: 7, kind: output, shape index: {}]
  %s8 = sld [smem:[#allocation0]]
  $region61: #{critic_forward.1} parent=0
    _
  %s10 = ssub.s32 1, %s8
  %s11 = scalar_select 0, %s10, %s8
  $region1: #{critic_forward.1} parent=0
    #allocation2 [shape = 'u8[1024]{0}', space=vmem, size = 0x400, scoped, tag = 'output window, operand 0']
    #allocation3 [shape = 's32[2]{0}', space=sflag, size = 0x8, scoped, tag = 'scoped memory for critic_forward.1']
    %12 = vsyncpa [#allocation3], 0
    %s13 = scalar_lea.sflag [#allocation3], 1
    %14 = vsyncpa %s13, 0
    loop: start=0, step=1, limit=5
    $region2: #{critic_forward.1} parent=1 // loop_pre_header
      _
    $region3: #{critic_forward.1} parent=1 // loop_header
      %s16 = sphi 0, %s20
      %p17 = scmp.ge.s32.totalorder %s16, 5
      %s26 = sphi 0, %s28
      %s29 = sphi 0, %s26
      %s30 = sphi 0, %s29
      %s46 = sphi 0, %s30
      %s52 = sphi 0, %s54
      %s55 = sphi 0, %s52
      %s56 = sphi 0, %s55
      %s72 = sphi 0, %s56
      %s76 = sphi 0, %s76
      %s78 = sphi 0, %s76
      %s79 = sphi 0, %s78
      %s93 = sphi 0, %s79
      %s97 = sphi 0, %s97
      %s99 = sphi 0, %s97
      %s100 = sphi 0, %s99
      %s114 = sphi 0, %s100
      %s118 = sphi 0, %s118
      %s120 = sphi 0, %s118
      %s121 = sphi 0, %s120
      %s135 = sphi 0, %s121
      %s139 = sphi 0, %s139
      %s141 = sphi 0, %s139
      %s142 = sphi 0, %s141
      %s156 = sphi 0, %s142
      %s160 = sphi 0, %s160
      %s162 = sphi 0, %s160
      %s163 = sphi 0, %s162
      %s177 = sphi 0, %s163
      %s183 = sphi 0, %s185
      %s186 = sphi 0, %s183
      %s187 = sphi 0, %s186
      %s203 = sphi 0, %s187
    $region4: #{critic_forward.1} parent=1 // loop_header_branch
      %19 = sbr.rel (%p17) target = $region8
    $region5: #{critic_forward.1} parent=1 // loop_body
      %s21 = ssub.s32 %s16, 1
      %s22 = ssub.s32 %s16, 2
      %s23 = sadd.s32 %s16, 1
      %s24 = ssub.s32 %s16, %s23
      %p25 = scmp.eq.s32.totalorder %s24, 0
      %s27 = sadd.s32 %s26, 1
      %s28 = scalar_select %p25, %s26, %s27
      %p31 = pneg %p25
      %p32 = scmp.eq.s32.totalorder %s16, 2
      %p33 = por %p31, %p32
      %p34 = scmp.ne.s32.totalorder %s26, %s29
      %p35 = scmp.eq.s32.totalorder %s16, 0
      %p36 = por %p34, %p35
      %p37 = scmp.ne.s32.totalorder %s26, %s29
      %p38 = scmp.eq.s32.totalorder %s21, 2
      %p39 = por %p37, %p38
      %p40 = scmp.ne.s32.totalorder %s29, %s30
      %p41 = scmp.eq.s32.totalorder %s21, 0
      %p42 = por %p40, %p41
      %p43 = scmp.ne.s32.totalorder %s29, %s30
      %p44 = scmp.eq.s32.totalorder %s22, 2
      %p45 = por %p43, %p44
      %p47 = scmp.ne.s32.totalorder %s30, %s46
      %p48 = scmp.eq.s32.totalorder %s22, 0
      %p49 = por %p47, %p48
      %s50 = ssub.s32 %s16, %s23
      %p51 = scmp.eq.s32.totalorder %s50, 0
      %s53 = sadd.s32 %s52, 1
      %s54 = scalar_select %p51, %s52, %s53
      %p57 = pneg %p51
      %p58 = scmp.eq.s32.totalorder %s16, 2
      %p59 = por %p57, %p58
      %p60 = scmp.ne.s32.totalorder %s52, %s55
      %p61 = scmp.eq.s32.totalorder %s16, 0
      %p62 = por %p60, %p61
      %p63 = scmp.ne.s32.totalorder %s52, %s55
      %p64 = scmp.eq.s32.totalorder %s21, 2
      %p65 = por %p63, %p64
      %p66 = scmp.ne.s32.totalorder %s55, %s56
      %p67 = scmp.eq.s32.totalorder %s21, 0
      %p68 = por %p66, %p67
      %p69 = scmp.ne.s32.totalorder %s55, %s56
      %p70 = scmp.eq.s32.totalorder %s22, 2
      %p71 = por %p69, %p70
      %p73 = scmp.ne.s32.totalorder %s56, %s72
      %p74 = scmp.eq.s32.totalorder %s22, 0
      %p75 = por %p73, %p74
      %s77 = sadd.s32 %s76, 1
      %p80 = scmp.eq.s32.totalorder %s16, 2
      %p81 = scmp.ne.s32.totalorder %s76, %s78
      %p82 = scmp.eq.s32.totalorder %s16, 0
      %p83 = por %p81, %p82
      %p84 = scmp.ne.s32.totalorder %s76, %s78
      %p85 = scmp.eq.s32.totalorder %s21, 2
      %p86 = por %p84, %p85
      %p87 = scmp.ne.s32.totalorder %s78, %s79
      %p88 = scmp.eq.s32.totalorder %s21, 0
      %p89 = por %p87, %p88
      %p90 = scmp.ne.s32.totalorder %s78, %s79
      %p91 = scmp.eq.s32.totalorder %s22, 2
      %p92 = por %p90, %p91
      %p94 = scmp.ne.s32.totalorder %s79, %s93
      %p95 = scmp.eq.s32.totalorder %s22, 0
      %p96 = por %p94, %p95
      %s98 = sadd.s32 %s97, 1
      %p101 = scmp.eq.s32.totalorder %s16, 2
      %p102 = scmp.ne.s32.totalorder %s97, %s99
      %p103 = scmp.eq.s32.totalorder %s16, 0
      %p104 = por %p102, %p103
      %p105 = scmp.ne.s32.totalorder %s97, %s99
      %p106 = scmp.eq.s32.totalorder %s21, 2
      %p107 = por %p105, %p106
      %p108 = scmp.ne.s32.totalorder %s99, %s100
      %p109 = scmp.eq.s32.totalorder %s21, 0
      %p110 = por %p108, %p109
      %p111 = scmp.ne.s32.totalorder %s99, %s100
      %p112 = scmp.eq.s32.totalorder %s22, 2
      %p113 = por %p111, %p112
      %p115 = scmp.ne.s32.totalorder %s100, %s114
      %p116 = scmp.eq.s32.totalorder %s22, 0
      %p117 = por %p115, %p116
      %s119 = sadd.s32 %s118, 1
      %p122 = scmp.eq.s32.totalorder %s16, 2
      %p123 = scmp.ne.s32.totalorder %s118, %s120
      %p124 = scmp.eq.s32.totalorder %s16, 0
      %p125 = por %p123, %p124
      %p126 = scmp.ne.s32.totalorder %s118, %s120
      %p127 = scmp.eq.s32.totalorder %s21, 2
      %p128 = por %p126, %p127
      %p129 = scmp.ne.s32.totalorder %s120, %s121
      %p130 = scmp.eq.s32.totalorder %s21, 0
      %p131 = por %p129, %p130
      %p132 = scmp.ne.s32.totalorder %s120, %s121
      %p133 = scmp.eq.s32.totalorder %s22, 2
      %p134 = por %p132, %p133
      %p136 = scmp.ne.s32.totalorder %s121, %s135
      %p137 = scmp.eq.s32.totalorder %s22, 0
      %p138 = por %p136, %p137
      %s140 = sadd.s32 %s139, 1
      %p143 = scmp.eq.s32.totalorder %s16, 2
      %p144 = scmp.ne.s32.totalorder %s139, %s141
      %p145 = scmp.eq.s32.totalorder %s16, 0
      %p146 = por %p144, %p145
      %p147 = scmp.ne.s32.totalorder %s139, %s141
      %p148 = scmp.eq.s32.totalorder %s21, 2
      %p149 = por %p147, %p148
      %p150 = scmp.ne.s32.totalorder %s141, %s142
      %p151 = scmp.eq.s32.totalorder %s21, 0
      %p152 = por %p150, %p151
      %p153 = scmp.ne.s32.totalorder %s141, %s142
      %p154 = scmp.eq.s32.totalorder %s22, 2
      %p155 = por %p153, %p154
      %p157 = scmp.ne.s32.totalorder %s142, %s156
      %p158 = scmp.eq.s32.totalorder %s22, 0
      %p159 = por %p157, %p158
      %s161 = sadd.s32 %s160, 1
      %p164 = scmp.eq.s32.totalorder %s16, 2
      %p165 = scmp.ne.s32.totalorder %s160, %s162
      %p166 = scmp.eq.s32.totalorder %s16, 0
      %p167 = por %p165, %p166
      %p168 = scmp.ne.s32.totalorder %s160, %s162
      %p169 = scmp.eq.s32.totalorder %s21, 2
      %p170 = por %p168, %p169
      %p171 = scmp.ne.s32.totalorder %s162, %s163
      %p172 = scmp.eq.s32.totalorder %s21, 0
      %p173 = por %p171, %p172
      %p174 = scmp.ne.s32.totalorder %s162, %s163
      %p175 = scmp.eq.s32.totalorder %s22, 2
      %p176 = por %p174, %p175
      %p178 = scmp.ne.s32.totalorder %s163, %s177
      %p179 = scmp.eq.s32.totalorder %s22, 0
      %p180 = por %p178, %p179
      %s181 = ssub.s32 %s16, %s23
      %p182 = scmp.eq.s32.totalorder %s181, 0
      %s184 = sadd.s32 %s183, 1
      %s185 = scalar_select %p182, %s183, %s184
      %p188 = pneg %p182
      %p189 = scmp.eq.s32.totalorder %s16, 2
      %p190 = por %p188, %p189
      %p191 = scmp.ne.s32.totalorder %s183, %s186
      %p192 = scmp.eq.s32.totalorder %s16, 0
      %p193 = por %p191, %p192
      %p194 = scmp.ne.s32.totalorder %s183, %s186
      %p195 = scmp.eq.s32.totalorder %s21, 2
      %p196 = por %p194, %p195
      %p197 = scmp.ne.s32.totalorder %s186, %s187
      %p198 = scmp.eq.s32.totalorder %s21, 0
      %p199 = por %p197, %p198
      %p200 = scmp.ne.s32.totalorder %s186, %s187
      %p201 = scmp.eq.s32.totalorder %s22, 2
      %p202 = por %p200, %p201
      %p204 = scmp.ne.s32.totalorder %s187, %s203
      %p205 = scmp.eq.s32.totalorder %s22, 0
      %p206 = por %p204, %p205
      %p207 = scmp.le.s32.totalorder 1, %s16
      %p208 = scmp.lt.s32.totalorder %s16, 4
      %p209 = pnand %p207, %p208
      %p210 = pneg %p209
      // Predicated region
      $region9: #{critic_forward.1} parent=5 // pred_check
        _
      $region10: #{critic_forward.1} parent=5 // pred_check_branch
        %212 = sbr.rel (%p209) target = $region12
      $region11: #{critic_forward.1} parent=5 // pred_region
        %s213 = ssub.s32 %s16, 1
        // Predicated region
        $region13: #{critic_forward.1} parent=11 // pred_check
          %p214 = pneg %p89
        $region14: #{critic_forward.1} parent=11 // pred_check_branch
          %216 = sbr.rel (%p214) target = $region16
        $region15: #{critic_forward.1} parent=11 // pred_region
          _
        $region16: #{critic_forward.1} parent=11 // pred_fallthru
          _
        // Predicated region
        $region17: #{critic_forward.1} parent=11 // pred_check
          %p217 = pneg %p110
        $region18: #{critic_forward.1} parent=11 // pred_check_branch
          %219 = sbr.rel (%p217) target = $region20
        $region19: #{critic_forward.1} parent=11 // pred_region
          _
        $region20: #{critic_forward.1} parent=11 // pred_fallthru
          _
        // Predicated region
        $region21: #{critic_forward.1} parent=11 // pred_check
          %p220 = pneg %p131
        $region22: #{critic_forward.1} parent=11 // pred_check_branch
          %222 = sbr.rel (%p220) target = $region24
        $region23: #{critic_forward.1} parent=11 // pred_region
          _
        $region24: #{critic_forward.1} parent=11 // pred_fallthru
          _
        // Predicated region
        $region25: #{critic_forward.1} parent=11 // pred_check
          %p223 = pneg %p152
        $region26: #{critic_forward.1} parent=11 // pred_check_branch
          %225 = sbr.rel (%p223) target = $region28
        $region27: #{critic_forward.1} parent=11 // pred_region
          _
        $region28: #{critic_forward.1} parent=11 // pred_fallthru
          _
        // Predicated region
        $region29: #{critic_forward.1} parent=11 // pred_check
          %p226 = pneg %p173
        $region30: #{critic_forward.1} parent=11 // pred_check_branch
          %228 = sbr.rel (%p226) target = $region32
        $region31: #{critic_forward.1} parent=11 // pred_region
          _
        $region32: #{critic_forward.1} parent=11 // pred_fallthru
          _
      $region12: #{critic_forward.1} parent=5 // pred_fallthru
        _
      %p229 = scmp.lt.s32.totalorder %s16, 3
      // Predicated region
      $region33: #{critic_forward.1} parent=5 // pred_check
        %p230 = pneg %p229
      $region34: #{critic_forward.1} parent=5 // pred_check_branch
        %232 = sbr.rel (%p230) target = $region36
      $region35: #{critic_forward.1} parent=5 // pred_region
        // Predicated region
        $region37: #{critic_forward.1} parent=35 // pred_check
          %p233 = pneg %p36
        $region38: #{critic_forward.1} parent=35 // pred_check_branch
          %235 = sbr.rel (%p233) target = $region40
        $region39: #{critic_forward.1} parent=35 // pred_region
          %s236 = smul.u32 16, %s16
          %p237 = scmp.lt.s32.totalorder %s236, 47
          %s238 = scalar_select %p237, %s236, 47
          %s239 = smul.addr %s238, 8
          %s240 = scalar_lea.vmem %s0, %s239
          %s241 = smul.u32 16, %s16
        $region40: #{critic_forward.1} parent=35 // pred_fallthru
          _
        // Predicated region
        $region41: #{critic_forward.1} parent=35 // pred_check
          %p242 = pneg %p62
        $region42: #{critic_forward.1} parent=35 // pred_check_branch
          %244 = sbr.rel (%p242) target = $region44
        $region43: #{critic_forward.1} parent=35 // pred_region
          %s245 = smul.u32 16, %s16
          %p246 = scmp.lt.s32.totalorder %s245, 47
          %s247 = scalar_select %p246, %s245, 47
          %s248 = smul.addr %s247, 8
          %s249 = scalar_lea.vmem %s1, %s248
          %s250 = smul.u32 16, %s16
        $region44: #{critic_forward.1} parent=35 // pred_fallthru
          _
      $region36: #{critic_forward.1} parent=5 // pred_fallthru
        _
      %p251 = scmp.le.s32.totalorder 1, %s16
      %p252 = scmp.lt.s32.totalorder %s16, 4
      %p253 = pnand %p251, %p252
      %p254 = pneg %p253
      // Predicated region
      $region45: #{critic_forward.1} parent=5 // pred_check
        _
      $region46: #{critic_forward.1} parent=5 // pred_check_branch
        %256 = sbr.rel (%p253) target = $region48
      $region47: #{critic_forward.1} parent=5 // pred_region
        %s257 = ssub.s32 %s16, 1
        %s258 = smul.u32 16, %s21
        %p259 = scmp.lt.s32.totalorder %s258, 47
        %s260 = scalar_select %p259, %s258, 47
        %s261 = smul.addr %s260, 8
        %s262 = scalar_lea.vmem %s0, %s261
        %p263 = pneg %p42
        %p264 = pneg %p39
        %s265 = smul.u32 16, %s21
        %p266 = scmp.lt.s32.totalorder %s265, 47
        %s267 = scalar_select %p266, %s265, 47
        %s268 = smul.addr %s267, 8
        %s269 = scalar_lea.vmem %s1, %s268
        %p270 = pneg %p68
        %p271 = pneg %p65
        %p272 = pneg %p89
        %p273 = pneg %p86
        %p274 = pneg %p110
        %p275 = pneg %p107
        %p276 = pneg %p131
        %p277 = pneg %p128
        %p278 = pneg %p152
        %p279 = pneg %p149
        %p280 = pneg %p173
        %p281 = pneg %p170
        %p282 = pneg %p199
        %p283 = pneg %p196
        %s284 = sand.u32 %s186, 1
        %s285 = scalar_lea.sflag [#allocation3], %s284
        %s286 = sand.u32 %s186, 1
        %s287 = scalar_lea.vmem [#allocation2], %s286
        %s288 = smul.u32 16, %s21
        %p289 = scmp.lt.s32.totalorder %s288, 47
        %s290 = scalar_select %p289, %s288, 47
        %s291 = smul.addr %s290, 8
        %s292 = scalar_lea.vmem %s0, %s291
        %s293 = smul.u32 16, %s21
        %s294 = smul.u32 16, %s21
        %p295 = scmp.lt.s32.totalorder %s294, 47
        %s296 = scalar_select %p295, %s294, 47
        %s297 = smul.addr %s296, 8
        %s298 = scalar_lea.vmem %s1, %s297
        %s299 = smul.u32 16, %s21
        %v301 = vld [vmem:[%s292] sm:$0xff]
        %v302 = vld [vmem:[%s292 + $0x8] sm:$0xff]
        %v303 = vld [vmem:[%s292 + $0x10] sm:$0xff]
        %v304 = vld [vmem:[%s292 + $0x18] sm:$0xff]
        %v305 = vld [vmem:[%s292 + $0x20] sm:$0xff]
        %v306 = vld [vmem:[%s292 + $0x28] sm:$0xff]
        %v307 = vld [vmem:[%s292 + $0x30] sm:$0xff]
        %v308 = vld [vmem:[%s292 + $0x38] sm:$0xff]
        %v309 = vld [vmem:[%s292 + $0x40] sm:$0xff]
        %v310 = vld [vmem:[%s292 + $0x48] sm:$0xff]
        %v311 = vld [vmem:[%s292 + $0x50] sm:$0xff]
        %v312 = vld [vmem:[%s292 + $0x58] sm:$0xff]
        %v313 = vld [vmem:[%s292 + $0x60] sm:$0xff]
        %v314 = vld [vmem:[%s292 + $0x68] sm:$0xff]
        %v315 = vld [vmem:[%s292 + $0x70] sm:$0xff]
        %v316 = vld [vmem:[%s292 + $0x78] sm:$0xff]
        %v317 = vld [vmem:[%s2] sm:$0xff]
        %v318 = vld [vmem:[%s2 + $0x8] sm:$0xff]
        %v319 = vld [vmem:[%s2 + $0x10] sm:$0xff]
        %v320 = vld [vmem:[%s298] sm:$0xff]
        %v321 = vld [vmem:[%s298 + $0x8] sm:$0xff]
        %v322 = vld [vmem:[%s298 + $0x10] sm:$0xff]
        %v323 = vld [vmem:[%s298 + $0x18] sm:$0xff]
        %v324 = vld [vmem:[%s298 + $0x20] sm:$0xff]
        %v325 = vld [vmem:[%s298 + $0x28] sm:$0xff]
        %v326 = vld [vmem:[%s298 + $0x30] sm:$0xff]
        %v327 = vld [vmem:[%s298 + $0x38] sm:$0xff]
        %v328 = vld [vmem:[%s298 + $0x40] sm:$0xff]
        %v329 = vld [vmem:[%s298 + $0x48] sm:$0xff]
        %v330 = vld [vmem:[%s298 + $0x50] sm:$0xff]
        %v331 = vld [vmem:[%s298 + $0x58] sm:$0xff]
        %v332 = vld [vmem:[%s298 + $0x60] sm:$0xff]
        %v333 = vld [vmem:[%s298 + $0x68] sm:$0xff]
        %v334 = vld [vmem:[%s298 + $0x70] sm:$0xff]
        %v335 = vld [vmem:[%s298 + $0x78] sm:$0xff]
        %v336 = vld [vmem:[%s3] sm:$0xff]
        %v337 = vld [vmem:[%s3 + $0x8] sm:$0xf]
        %vm338 = vcmask 97280
        %v340 = vsel %vm338, %v320, 0
        %v343 = vsel %vm338, %v321, 0
        %v346 = vsel %vm338, %v322, 0
        %v349 = vsel %vm338, %v323, 0
        %v352 = vsel %vm338, %v324, 0
        %v355 = vsel %vm338, %v325, 0
        %v358 = vsel %vm338, %v326, 0
        %v361 = vsel %vm338, %v327, 0
        %v364 = vsel %vm338, %v328, 0
        %v367 = vsel %vm338, %v329, 0
        %v370 = vsel %vm338, %v330, 0
        %v373 = vsel %vm338, %v331, 0
        %v376 = vsel %vm338, %v332, 0
        %v379 = vsel %vm338, %v333, 0
        %v382 = vsel %vm338, %v334, 0
        %v385 = vsel %vm338, %v335, 0
        %vm387 = vcmask 1043456
        %v389 = vsel %vm387, %v337, 0
        %391 = vmatprep.subr.mxu0 0.0
        %392 = vmatpush1.msra.mxu0 0.0
        %393 = vmatprep.subr.mxu0 0.0
        %394 = vmatpush1.msra.mxu0 0.0
        %395 = vmatprep.subr.mxu0 0.0
        %396 = vmatpush1.msra.mxu0 0.0
        %397 = vmatprep.subr.mxu0 0.0
        %398 = vmatpush1.msra.mxu0 0.0
        %399 = vmatprep.subr.mxu0 0.0
        %400 = vmatpush1.msra.mxu0 0.0
        %401 = vmatprep.subr.mxu0 0.0
        %402 = vmatpush1.msra.mxu0 0.0
        %403 = vmatprep.subr.mxu0 0.0
        %404 = vmatpush1.msra.mxu0 0.0
        %405 = vmatprep.subr.mxu0 0.0
        %406 = vmatpush1.msra.mxu0 0.0
        %407 = vmatprep.subr.mxu0 0.0
        %408 = vmatpush1.msra.mxu0 0.0
        %409 = vmatprep.subr.mxu0 0.0
        %410 = vmatpush1.msra.mxu0 0.0
        %411 = vmatprep.subr.mxu0 0.0
        %412 = vmatpush1.msra.mxu0 0.0
        %413 = vmatprep.subr.mxu0 0.0
        %414 = vmatpush1.msra.mxu0 0.0
        %415 = vmatprep.subr.mxu0 0.0
        %416 = vmatpush1.msra.mxu0 0.0
        %417 = vmatprep.subr.mxu0 0.0
        %418 = vmatpush1.msra.mxu0 0.0
        %419 = vmatprep.subr.mxu0 0.0
        %420 = vmatpush1.msra.mxu0 %v389
        %421 = vmatprep.subr.mxu0 0.0
        %422 = vmatpush1.msra.mxu0 %v336
        %423 = vmatprep.subr.mxu0 0.0
        %424 = vmatpush2.msra.mxu0 0.0
        %425 = vmatprep.subr.mxu0 0.0
        %426 = vmatpush2.msra.mxu0 0.0
        %427 = vmatprep.subr.mxu0 0.0
        %428 = vmatpush2.msra.mxu0 0.0
        %429 = vmatprep.subr.mxu0 0.0
        %430 = vmatpush2.msra.mxu0 0.0
        %431 = vmatprep.subr.mxu0 0.0
        %432 = vmatpush2.msra.mxu0 0.0
        %433 = vmatprep.subr.mxu0 0.0
        %434 = vmatpush2.msra.mxu0 0.0
        %435 = vmatprep.subr.mxu0 0.0
        %436 = vmatpush2.msra.mxu0 0.0
        %437 = vmatprep.subr.mxu0 0.0
        %438 = vmatpush2.msra.mxu0 0.0
        %439 = vmatprep.subr.mxu0 0.0
        %440 = vmatpush2.msra.mxu0 0.0
        %441 = vmatprep.subr.mxu0 0.0
        %442 = vmatpush2.msra.mxu0 0.0
        %443 = vmatprep.subr.mxu0 0.0
        %444 = vmatpush2.msra.mxu0 0.0
        %445 = vmatprep.subr.mxu0 0.0
        %446 = vmatpush2.msra.mxu0 0.0
        %447 = vmatprep.subr.mxu0 0.0
        %448 = vmatpush2.msra.mxu0 0.0
        %449 = vmatprep.subr.mxu0 0.0
        %450 = vmatpush2.msra.mxu0 0.0
        %451 = vmatprep.subr.mxu0 0.0
        %452 = vmatpush2.msra.mxu0 0.0
        %453 = vmatprep.subr.mxu0 0.0
        %454 = vmatpush2.msra.mxu0 0.0
        %455 = vmatprep.mubr.f32.mxu0 0.0
        %456 = vmatmul.mubr.f32.gmra.mxu0 %v340
        %v457 = vpop.f32.mrf.mxu0
        %v458 = vadd.f32 0.0, %v457
        %v459 = vpop.f32.mrf.mxu0
        %460 = vmatprep.mubr.f32.mxu0 0.0
        %461 = vmatmul.mubr.f32.gmra.mxu0 %v343
        %v462 = vpop.f32.mrf.mxu0
        %v463 = vadd.f32 0.0, %v462
        %v464 = vpop.f32.mrf.mxu0
        %465 = vmatprep.mubr.f32.mxu0 0.0
        %466 = vmatmul.mubr.f32.gmra.mxu0 %v346
        %v467 = vpop.f32.mrf.mxu0
        %v468 = vadd.f32 0.0, %v467
        %v469 = vpop.f32.mrf.mxu0
        %470 = vmatprep.mubr.f32.mxu0 0.0
        %471 = vmatmul.mubr.f32.gmra.mxu0 %v349
        %v472 = vpop.f32.mrf.mxu0
        %v473 = vadd.f32 0.0, %v472
        %v474 = vpop.f32.mrf.mxu0
        %475 = vmatprep.mubr.f32.mxu0 0.0
        %476 = vmatmul.mubr.f32.gmra.mxu0 %v352
        %v477 = vpop.f32.mrf.mxu0
        %v478 = vadd.f32 0.0, %v477
        %v479 = vpop.f32.mrf.mxu0
        %480 = vmatprep.mubr.f32.mxu0 0.0
        %481 = vmatmul.mubr.f32.gmra.mxu0 %v355
        %v482 = vpop.f32.mrf.mxu0
        %v483 = vadd.f32 0.0, %v482
        %v484 = vpop.f32.mrf.mxu0
        %485 = vmatprep.mubr.f32.mxu0 0.0
        %486 = vmatmul.mubr.f32.gmra.mxu0 %v358
        %v487 = vpop.f32.mrf.mxu0
        %v488 = vadd.f32 0.0, %v487
        %v489 = vpop.f32.mrf.mxu0
        %490 = vmatprep.mubr.f32.mxu0 0.0
        %491 = vmatmul.mubr.f32.gmra.mxu0 %v361
        %v492 = vpop.f32.mrf.mxu0
        %v493 = vadd.f32 0.0, %v492
        %v494 = vpop.f32.mrf.mxu0
        %495 = vmatprep.mubr.f32.mxu0 0.0
        %496 = vmatmul.mubr.f32.gmra.mxu0 %v364
        %v497 = vpop.f32.mrf.mxu0
        %v498 = vadd.f32 0.0, %v497
        %v499 = vpop.f32.mrf.mxu0
        %500 = vmatprep.mubr.f32.mxu0 0.0
        %501 = vmatmul.mubr.f32.gmra.mxu0 %v367
        %v502 = vpop.f32.mrf.mxu0
        %v503 = vadd.f32 0.0, %v502
        %v504 = vpop.f32.mrf.mxu0
        %505 = vmatprep.mubr.f32.mxu0 0.0
        %506 = vmatmul.mubr.f32.gmra.mxu0 %v370
        %v507 = vpop.f32.mrf.mxu0
        %v508 = vadd.f32 0.0, %v507
        %v509 = vpop.f32.mrf.mxu0
        %510 = vmatprep.mubr.f32.mxu0 0.0
        %511 = vmatmul.mubr.f32.gmra.mxu0 %v373
        %v512 = vpop.f32.mrf.mxu0
        %v513 = vadd.f32 0.0, %v512
        %v514 = vpop.f32.mrf.mxu0
        %515 = vmatprep.mubr.f32.mxu0 0.0
        %516 = vmatmul.mubr.f32.gmra.mxu0 %v376
        %v517 = vpop.f32.mrf.mxu0
        %v518 = vadd.f32 0.0, %v517
        %v519 = vpop.f32.mrf.mxu0
        %520 = vmatprep.mubr.f32.mxu0 0.0
        %521 = vmatmul.mubr.f32.gmra.mxu0 %v379
        %v522 = vpop.f32.mrf.mxu0
        %v523 = vadd.f32 0.0, %v522
        %v524 = vpop.f32.mrf.mxu0
        %525 = vmatprep.mubr.f32.mxu0 0.0
        %526 = vmatmul.mubr.f32.gmra.mxu0 %v382
        %v527 = vpop.f32.mrf.mxu0
        %v528 = vadd.f32 0.0, %v527
        %v529 = vpop.f32.mrf.mxu0
        %530 = vmatprep.mubr.f32.mxu0 0.0
        %531 = vmatmul.mubr.f32.gmra.mxu0 %v385
        %v532 = vpop.f32.mrf.mxu0
        %v533 = vadd.f32 0.0, %v532
        %v534 = vpop.f32.mrf.mxu0
        %535 = vdwg.mxu0
        %vm536 = vcmask 195584
        %v538 = vsel %vm536, %v301, 0
        %v541 = vsel %vm536, %v302, 0
        %v544 = vsel %vm536, %v303, 0
        %v547 = vsel %vm536, %v304, 0
        %v550 = vsel %vm536, %v305, 0
        %v553 = vsel %vm536, %v306, 0
        %v556 = vsel %vm536, %v307, 0
        %v559 = vsel %vm536, %v308, 0
        %v562 = vsel %vm536, %v309, 0
        %v565 = vsel %vm536, %v310, 0
        %v568 = vsel %vm536, %v311, 0
        %v571 = vsel %vm536, %v312, 0
        %v574 = vsel %vm536, %v313, 0
        %v577 = vsel %vm536, %v314, 0
        %v580 = vsel %vm536, %v315, 0
        %v583 = vsel %vm536, %v316, 0
        %585 = vmatprep.subr.mxu0 0.0
        %586 = vmatpush1.msra.mxu0 0.0
        %587 = vmatprep.subr.mxu0 0.0
        %588 = vmatpush1.msra.mxu0 0.0
        %589 = vmatprep.subr.mxu0 0.0
        %590 = vmatpush1.msra.mxu0 0.0
        %591 = vmatprep.subr.mxu0 0.0
        %592 = vmatpush1.msra.mxu0 0.0
        %593 = vmatprep.subr.mxu0 0.0
        %594 = vmatpush1.msra.mxu0 0.0
        %595 = vmatprep.subr.mxu0 0.0
        %596 = vmatpush1.msra.mxu0 0.0
        %597 = vmatprep.subr.mxu0 0.0
        %598 = vmatpush1.msra.mxu0 0.0
        %599 = vmatprep.subr.mxu0 0.0
        %600 = vmatpush1.msra.mxu0 0.0
        %601 = vmatprep.subr.mxu0 0.0
        %602 = vmatpush1.msra.mxu0 0.0
        %603 = vmatprep.subr.mxu0 0.0
        %604 = vmatpush1.msra.mxu0 0.0
        %605 = vmatprep.subr.mxu0 0.0
        %606 = vmatpush1.msra.mxu0 0.0
        %607 = vmatprep.subr.mxu0 0.0
        %608 = vmatpush1.msra.mxu0 0.0
        %609 = vmatprep.subr.mxu0 0.0
        %610 = vmatpush1.msra.mxu0 0.0
        %611 = vmatprep.subr.mxu0 0.0
        %612 = vmatpush1.msra.mxu0 %v319
        %613 = vmatprep.subr.mxu0 0.0
        %614 = vmatpush1.msra.mxu0 %v318
        %615 = vmatprep.subr.mxu0 0.0
        %616 = vmatpush1.msra.mxu0 %v317
        %617 = vmatprep.subr.mxu0 0.0
        %618 = vmatpush2.msra.mxu0 0.0
        %619 = vmatprep.subr.mxu0 0.0
        %620 = vmatpush2.msra.mxu0 0.0
        %621 = vmatprep.subr.mxu0 0.0
        %622 = vmatpush2.msra.mxu0 0.0
        %623 = vmatprep.subr.mxu0 0.0
        %624 = vmatpush2.msra.mxu0 0.0
        %625 = vmatprep.subr.mxu0 0.0
        %626 = vmatpush2.msra.mxu0 0.0
        %627 = vmatprep.subr.mxu0 0.0
        %628 = vmatpush2.msra.mxu0 0.0
        %629 = vmatprep.subr.mxu0 0.0
        %630 = vmatpush2.msra.mxu0 0.0
        %631 = vmatprep.subr.mxu0 0.0
        %632 = vmatpush2.msra.mxu0 0.0
        %633 = vmatprep.subr.mxu0 0.0
        %634 = vmatpush2.msra.mxu0 0.0
        %635 = vmatprep.subr.mxu0 0.0
        %636 = vmatpush2.msra.mxu0 0.0
        %637 = vmatprep.subr.mxu0 0.0
        %638 = vmatpush2.msra.mxu0 0.0
        %639 = vmatprep.subr.mxu0 0.0
        %640 = vmatpush2.msra.mxu0 0.0
        %641 = vmatprep.subr.mxu0 0.0
        %642 = vmatpush2.msra.mxu0 0.0
        %643 = vmatprep.subr.mxu0 0.0
        %644 = vmatpush2.msra.mxu0 0.0
        %645 = vmatprep.subr.mxu0 0.0
        %646 = vmatpush2.msra.mxu0 0.0
        %647 = vmatprep.subr.mxu0 0.0
        %648 = vmatpush2.msra.mxu0 0.0
        %649 = vmatprep.mubr.f32.mxu0 0.0
        %650 = vmatmul.mubr.f32.gmra.mxu0 %v538
        %v651 = vpop.f32.mrf.mxu0
        %v652 = vadd.f32 %v458, %v651
        %v653 = vpop.f32.mrf.mxu0
        %654 = vmatprep.mubr.f32.mxu0 0.0
        %655 = vmatmul.mubr.f32.gmra.mxu0 %v541
        %v656 = vpop.f32.mrf.mxu0
        %v657 = vadd.f32 %v463, %v656
        %v658 = vpop.f32.mrf.mxu0
        %659 = vmatprep.mubr.f32.mxu0 0.0
        %660 = vmatmul.mubr.f32.gmra.mxu0 %v544
        %v661 = vpop.f32.mrf.mxu0
        %v662 = vadd.f32 %v468, %v661
        %v663 = vpop.f32.mrf.mxu0
        %664 = vmatprep.mubr.f32.mxu0 0.0
        %665 = vmatmul.mubr.f32.gmra.mxu0 %v547
        %v666 = vpop.f32.mrf.mxu0
        %v667 = vadd.f32 %v473, %v666
        %v668 = vpop.f32.mrf.mxu0
        %669 = vmatprep.mubr.f32.mxu0 0.0
        %670 = vmatmul.mubr.f32.gmra.mxu0 %v550
        %v671 = vpop.f32.mrf.mxu0
        %v672 = vadd.f32 %v478, %v671
        %v673 = vpop.f32.mrf.mxu0
        %674 = vmatprep.mubr.f32.mxu0 0.0
        %675 = vmatmul.mubr.f32.gmra.mxu0 %v553
        %v676 = vpop.f32.mrf.mxu0
        %v677 = vadd.f32 %v483, %v676
        %v678 = vpop.f32.mrf.mxu0
        %679 = vmatprep.mubr.f32.mxu0 0.0
        %680 = vmatmul.mubr.f32.gmra.mxu0 %v556
        %v681 = vpop.f32.mrf.mxu0
        %v682 = vadd.f32 %v488, %v681
        %v683 = vpop.f32.mrf.mxu0
        %684 = vmatprep.mubr.f32.mxu0 0.0
        %685 = vmatmul.mubr.f32.gmra.mxu0 %v559
        %v686 = vpop.f32.mrf.mxu0
        %v687 = vadd.f32 %v493, %v686
        %v688 = vpop.f32.mrf.mxu0
        %689 = vmatprep.mubr.f32.mxu0 0.0
        %690 = vmatmul.mubr.f32.gmra.mxu0 %v562
        %v691 = vpop.f32.mrf.mxu0
        %v692 = vadd.f32 %v498, %v691
        %v693 = vpop.f32.mrf.mxu0
        %694 = vmatprep.mubr.f32.mxu0 0.0
        %695 = vmatmul.mubr.f32.gmra.mxu0 %v565
        %v696 = vpop.f32.mrf.mxu0
        %v697 = vadd.f32 %v503, %v696
        %v698 = vpop.f32.mrf.mxu0
        %699 = vmatprep.mubr.f32.mxu0 0.0
        %700 = vmatmul.mubr.f32.gmra.mxu0 %v568
        %v701 = vpop.f32.mrf.mxu0
        %v702 = vadd.f32 %v508, %v701
        %v703 = vpop.f32.mrf.mxu0
        %704 = vmatprep.mubr.f32.mxu0 0.0
        %705 = vmatmul.mubr.f32.gmra.mxu0 %v571
        %v706 = vpop.f32.mrf.mxu0
        %v707 = vadd.f32 %v513, %v706
        %v708 = vpop.f32.mrf.mxu0
        %709 = vmatprep.mubr.f32.mxu0 0.0
        %710 = vmatmul.mubr.f32.gmra.mxu0 %v574
        %v711 = vpop.f32.mrf.mxu0
        %v712 = vadd.f32 %v518, %v711
        %v713 = vpop.f32.mrf.mxu0
        %714 = vmatprep.mubr.f32.mxu0 0.0
        %715 = vmatmul.mubr.f32.gmra.mxu0 %v577
        %v716 = vpop.f32.mrf.mxu0
        %v717 = vadd.f32 %v523, %v716
        %v718 = vpop.f32.mrf.mxu0
        %719 = vmatprep.mubr.f32.mxu0 0.0
        %720 = vmatmul.mubr.f32.gmra.mxu0 %v580
        %v721 = vpop.f32.mrf.mxu0
        %v722 = vadd.f32 %v528, %v721
        %v723 = vpop.f32.mrf.mxu0
        %724 = vmatprep.mubr.f32.mxu0 0.0
        %725 = vmatmul.mubr.f32.gmra.mxu0 %v583
        %v726 = vpop.f32.mrf.mxu0
        %v727 = vadd.f32 %v533, %v726
        %v728 = vpop.f32.mrf.mxu0
        %729 = vdwg.mxu0
        %v730 = vld [vmem:[%s4] sm:$0x1]
        %v731 = vlaneseq
        %v732 = vshrl.u32 %v731, 7
        %v733 = vsub.s32 0, %v732
        %v734 = vrot.slane %v730, %v733
        %v735 = vadd.f32 %v652, %v734
        %v736 = vadd.f32 %v657, %v734
        %v737 = vadd.f32 %v662, %v734
        %v738 = vadd.f32 %v667, %v734
        %v739 = vadd.f32 %v672, %v734
        %v740 = vadd.f32 %v677, %v734
        %v741 = vadd.f32 %v682, %v734
        %v742 = vadd.f32 %v687, %v734
        %v743 = vadd.f32 %v692, %v734
        %v744 = vadd.f32 %v697, %v734
        %v745 = vadd.f32 %v702, %v734
        %v746 = vadd.f32 %v707, %v734
        %v747 = vadd.f32 %v712, %v734
        %v748 = vadd.f32 %v717, %v734
        %v749 = vadd.f32 %v722, %v734
        %v750 = vadd.f32 %v727, %v734
        %v751 = vld [vmem:[%s4 + $0x1] sm:$0x1]
        %v752 = vld [vmem:[%s4 + $0x2] sm:$0x1]
        %753 = vadd.xlane.f32.xlu0 %v735
        %v754 = vpop.xlane.xlu0 %753
        %755 = vadd.xlane.f32.xlu0 %v736
        %v756 = vpop.xlane.xlu0 %755
        %757 = vadd.xlane.f32.xlu0 %v737
        %v758 = vpop.xlane.xlu0 %757
        %759 = vadd.xlane.f32.xlu0 %v738
        %v760 = vpop.xlane.xlu0 %759
        %761 = vadd.xlane.f32.xlu0 %v739
        %v762 = vpop.xlane.xlu0 %761
        %763 = vadd.xlane.f32.xlu0 %v740
        %v764 = vpop.xlane.xlu0 %763
        %765 = vadd.xlane.f32.xlu0 %v741
        %v766 = vpop.xlane.xlu0 %765
        %767 = vadd.xlane.f32.xlu0 %v742
        %v768 = vpop.xlane.xlu0 %767
        %769 = vadd.xlane.f32.xlu0 %v743
        %v770 = vpop.xlane.xlu0 %769
        %771 = vadd.xlane.f32.xlu0 %v744
        %v772 = vpop.xlane.xlu0 %771
        %773 = vadd.xlane.f32.xlu0 %v745
        %v774 = vpop.xlane.xlu0 %773
        %775 = vadd.xlane.f32.xlu0 %v746
        %v776 = vpop.xlane.xlu0 %775
        %777 = vadd.xlane.f32.xlu0 %v747
        %v778 = vpop.xlane.xlu0 %777
        %779 = vadd.xlane.f32.xlu0 %v748
        %v780 = vpop.xlane.xlu0 %779
        %781 = vadd.xlane.f32.xlu0 %v749
        %v782 = vpop.xlane.xlu0 %781
        %783 = vadd.xlane.f32.xlu0 %v750
        %v784 = vpop.xlane.xlu0 %783
        %v785 = vmul.f32 %v754, 0.0078125
        %v786 = vmul.f32 %v756, 0.0078125
        %v787 = vmul.f32 %v758, 0.0078125
        %v788 = vmul.f32 %v760, 0.0078125
        %v789 = vmul.f32 %v762, 0.0078125
        %v790 = vmul.f32 %v764, 0.0078125
        %v791 = vmul.f32 %v766, 0.0078125
        %v792 = vmul.f32 %v768, 0.0078125
        %v793 = vmul.f32 %v770, 0.0078125
        %v794 = vmul.f32 %v772, 0.0078125
        %v795 = vmul.f32 %v774, 0.0078125
        %v796 = vmul.f32 %v776, 0.0078125
        %v797 = vmul.f32 %v778, 0.0078125
        %v798 = vmul.f32 %v780, 0.0078125
        %v799 = vmul.f32 %v782, 0.0078125
        %v800 = vmul.f32 %v784, 0.0078125
        %v801 = vmul.f32 %v735, %v735
        %v802 = vmul.f32 %v736, %v736
        %v803 = vmul.f32 %v737, %v737
        %v804 = vmul.f32 %v738, %v738
        %v805 = vmul.f32 %v739, %v739
        %v806 = vmul.f32 %v740, %v740
        %v807 = vmul.f32 %v741, %v741
        %v808 = vmul.f32 %v742, %v742
        %v809 = vmul.f32 %v743, %v743
        %v810 = vmul.f32 %v744, %v744
        %v811 = vmul.f32 %v745, %v745
        %v812 = vmul.f32 %v746, %v746
        %v813 = vmul.f32 %v747, %v747
        %v814 = vmul.f32 %v748, %v748
        %v815 = vmul.f32 %v749, %v749
        %v816 = vmul.f32 %v750, %v750
        %817 = vadd.xlane.f32.xlu0 %v801
        %v818 = vpop.xlane.xlu0 %817
        %819 = vadd.xlane.f32.xlu0 %v802
        %v820 = vpop.xlane.xlu0 %819
        %821 = vadd.xlane.f32.xlu0 %v803
        %v822 = vpop.xlane.xlu0 %821
        %823 = vadd.xlane.f32.xlu0 %v804
        %v824 = vpop.xlane.xlu0 %823
        %825 = vadd.xlane.f32.xlu0 %v805
        %v826 = vpop.xlane.xlu0 %825
        %827 = vadd.xlane.f32.xlu0 %v806
        %v828 = vpop.xlane.xlu0 %827
        %829 = vadd.xlane.f32.xlu0 %v807
        %v830 = vpop.xlane.xlu0 %829
        %831 = vadd.xlane.f32.xlu0 %v808
        %v832 = vpop.xlane.xlu0 %831
        %833 = vadd.xlane.f32.xlu0 %v809
        %v834 = vpop.xlane.xlu0 %833
        %835 = vadd.xlane.f32.xlu0 %v810
        %v836 = vpop.xlane.xlu0 %835
        %837 = vadd.xlane.f32.xlu0 %v811
        %v838 = vpop.xlane.xlu0 %837
        %839 = vadd.xlane.f32.xlu0 %v812
        %v840 = vpop.xlane.xlu0 %839
        %841 = vadd.xlane.f32.xlu0 %v813
        %v842 = vpop.xlane.xlu0 %841
        %843 = vadd.xlane.f32.xlu0 %v814
        %v844 = vpop.xlane.xlu0 %843
        %845 = vadd.xlane.f32.xlu0 %v815
        %v846 = vpop.xlane.xlu0 %845
        %847 = vadd.xlane.f32.xlu0 %v816
        %v848 = vpop.xlane.xlu0 %847
        %v849 = vmul.f32 %v818, 0.0078125
        %v850 = vmul.f32 %v820, 0.0078125
        %v851 = vmul.f32 %v822, 0.0078125
        %v852 = vmul.f32 %v824, 0.0078125
        %v853 = vmul.f32 %v826, 0.0078125
        %v854 = vmul.f32 %v828, 0.0078125
        %v855 = vmul.f32 %v830, 0.0078125
        %v856 = vmul.f32 %v832, 0.0078125
        %v857 = vmul.f32 %v834, 0.0078125
        %v858 = vmul.f32 %v836, 0.0078125
        %v859 = vmul.f32 %v838, 0.0078125
        %v860 = vmul.f32 %v840, 0.0078125
        %v861 = vmul.f32 %v842, 0.0078125
        %v862 = vmul.f32 %v844, 0.0078125
        %v863 = vmul.f32 %v846, 0.0078125
        %v864 = vmul.f32 %v848, 0.0078125
        %v865 = vmul.f32 %v785, %v785
        %v866 = vmul.f32 %v786, %v786
        %v867 = vmul.f32 %v787, %v787
        %v868 = vmul.f32 %v788, %v788
        %v869 = vmul.f32 %v789, %v789
        %v870 = vmul.f32 %v790, %v790
        %v871 = vmul.f32 %v791, %v791
        %v872 = vmul.f32 %v792, %v792
        %v873 = vmul.f32 %v793, %v793
        %v874 = vmul.f32 %v794, %v794
        %v875 = vmul.f32 %v795, %v795
        %v876 = vmul.f32 %v796, %v796
        %v877 = vmul.f32 %v797, %v797
        %v878 = vmul.f32 %v798, %v798
        %v879 = vmul.f32 %v799, %v799
        %v880 = vmul.f32 %v800, %v800
        %v881 = vsub.f32 %v849, %v865
        %v882 = vsub.f32 %v850, %v866
        %v883 = vsub.f32 %v851, %v867
        %v884 = vsub.f32 %v852, %v868
        %v885 = vsub.f32 %v853, %v869
        %v886 = vsub.f32 %v854, %v870
        %v887 = vsub.f32 %v855, %v871
        %v888 = vsub.f32 %v856, %v872
        %v889 = vsub.f32 %v857, %v873
        %v890 = vsub.f32 %v858, %v874
        %v891 = vsub.f32 %v859, %v875
        %v892 = vsub.f32 %v860, %v876
        %v893 = vsub.f32 %v861, %v877
        %v894 = vsub.f32 %v862, %v878
        %v895 = vsub.f32 %v863, %v879
        %v896 = vsub.f32 %v864, %v880
        %v897 = vmax.f32 %v881, 0.0
        %v898 = vmax.f32 %v882, 0.0
        %v899 = vmax.f32 %v883, 0.0
        %v900 = vmax.f32 %v884, 0.0
        %v901 = vmax.f32 %v885, 0.0
        %v902 = vmax.f32 %v886, 0.0
        %v903 = vmax.f32 %v887, 0.0
        %v904 = vmax.f32 %v888, 0.0
        %v905 = vmax.f32 %v889, 0.0
        %v906 = vmax.f32 %v890, 0.0
        %v907 = vmax.f32 %v891, 0.0
        %v908 = vmax.f32 %v892, 0.0
        %v909 = vmax.f32 %v893, 0.0
        %v910 = vmax.f32 %v894, 0.0
        %v911 = vmax.f32 %v895, 0.0
        %v912 = vmax.f32 %v896, 0.0
        %v913 = vsub.f32 %v735, %v785
        %v914 = vsub.f32 %v736, %v786
        %v915 = vsub.f32 %v737, %v787
        %v916 = vsub.f32 %v738, %v788
        %v917 = vsub.f32 %v739, %v789
        %v918 = vsub.f32 %v740, %v790
        %v919 = vsub.f32 %v741, %v791
        %v920 = vsub.f32 %v742, %v792
        %v921 = vsub.f32 %v743, %v793
        %v922 = vsub.f32 %v744, %v794
        %v923 = vsub.f32 %v745, %v795
        %v924 = vsub.f32 %v746, %v796
        %v925 = vsub.f32 %v747, %v797
        %v926 = vsub.f32 %v748, %v798
        %v927 = vsub.f32 %v749, %v799
        %v928 = vsub.f32 %v750, %v800
        %v929 = vadd.f32 %v897, 1e-05
        %v930 = vadd.f32 %v898, 1e-05
        %v931 = vadd.f32 %v899, 1e-05
        %v932 = vadd.f32 %v900, 1e-05
        %v933 = vadd.f32 %v901, 1e-05
        %v934 = vadd.f32 %v902, 1e-05
        %v935 = vadd.f32 %v903, 1e-05
        %v936 = vadd.f32 %v904, 1e-05
        %v937 = vadd.f32 %v905, 1e-05
        %v938 = vadd.f32 %v906, 1e-05
        %v939 = vadd.f32 %v907, 1e-05
        %v940 = vadd.f32 %v908, 1e-05
        %v941 = vadd.f32 %v909, 1e-05
        %v942 = vadd.f32 %v910, 1e-05
        %v943 = vadd.f32 %v911, 1e-05
        %v944 = vadd.f32 %v912, 1e-05
        %v945 = vrsqrt.pop %v929
        %v946 = vrsqrt.pop %v930
        %v947 = vrsqrt.pop %v931
        %v948 = vrsqrt.pop %v932
        %v949 = vrsqrt.pop %v933
        %v950 = vrsqrt.pop %v934
        %v951 = vrsqrt.pop %v935
        %v952 = vrsqrt.pop %v936
        %v953 = vrsqrt.pop %v937
        %v954 = vrsqrt.pop %v938
        %v955 = vrsqrt.pop %v939
        %v956 = vrsqrt.pop %v940
        %v957 = vrsqrt.pop %v941
        %v958 = vrsqrt.pop %v942
        %v959 = vrsqrt.pop %v943
        %v960 = vrsqrt.pop %v944
        %v961 = vmul.f32 %v913, %v945
        %v962 = vmul.f32 %v914, %v946
        %v963 = vmul.f32 %v915, %v947
        %v964 = vmul.f32 %v916, %v948
        %v965 = vmul.f32 %v917, %v949
        %v966 = vmul.f32 %v918, %v950
        %v967 = vmul.f32 %v919, %v951
        %v968 = vmul.f32 %v920, %v952
        %v969 = vmul.f32 %v921, %v953
        %v970 = vmul.f32 %v922, %v954
        %v971 = vmul.f32 %v923, %v955
        %v972 = vmul.f32 %v924, %v956
        %v973 = vmul.f32 %v925, %v957
        %v974 = vmul.f32 %v926, %v958
        %v975 = vmul.f32 %v927, %v959
        %v976 = vmul.f32 %v928, %v960
        %v977 = vlaneseq
        %v978 = vshrl.u32 %v977, 7
        %v979 = vsub.s32 0, %v978
        %v980 = vrot.slane %v751, %v979
        %v981 = vmul.f32 %v961, %v980
        %v982 = vmul.f32 %v962, %v980
        %v983 = vmul.f32 %v963, %v980
        %v984 = vmul.f32 %v964, %v980
        %v985 = vmul.f32 %v965, %v980
        %v986 = vmul.f32 %v966, %v980
        %v987 = vmul.f32 %v967, %v980
        %v988 = vmul.f32 %v968, %v980
        %v989 = vmul.f32 %v969, %v980
        %v990 = vmul.f32 %v970, %v980
        %v991 = vmul.f32 %v971, %v980
        %v992 = vmul.f32 %v972, %v980
        %v993 = vmul.f32 %v973, %v980
        %v994 = vmul.f32 %v974, %v980
        %v995 = vmul.f32 %v975, %v980
        %v996 = vmul.f32 %v976, %v980
        %v997 = vlaneseq
        %v998 = vshrl.u32 %v997, 7
        %v999 = vsub.s32 0, %v998
        %v1000 = vrot.slane %v752, %v999
        %v1001 = vadd.f32 %v981, %v1000
        %v1002 = vadd.f32 %v982, %v1000
        %v1003 = vadd.f32 %v983, %v1000
        %v1004 = vadd.f32 %v984, %v1000
        %v1005 = vadd.f32 %v985, %v1000
        %v1006 = vadd.f32 %v986, %v1000
        %v1007 = vadd.f32 %v987, %v1000
        %v1008 = vadd.f32 %v988, %v1000
        %v1009 = vadd.f32 %v989, %v1000
        %v1010 = vadd.f32 %v990, %v1000
        %v1011 = vadd.f32 %v991, %v1000
        %v1012 = vadd.f32 %v992, %v1000
        %v1013 = vadd.f32 %v993, %v1000
        %v1014 = vadd.f32 %v994, %v1000
        %v1015 = vadd.f32 %v995, %v1000
        %v1016 = vadd.f32 %v996, %v1000
        %v1017 = vmax.f32 %v1001, 0.0
        %v1018 = vmax.f32 %v1002, 0.0
        %v1019 = vmax.f32 %v1003, 0.0
        %v1020 = vmax.f32 %v1004, 0.0
        %v1021 = vmax.f32 %v1005, 0.0
        %v1022 = vmax.f32 %v1006, 0.0
        %v1023 = vmax.f32 %v1007, 0.0
        %v1024 = vmax.f32 %v1008, 0.0
        %v1025 = vmax.f32 %v1009, 0.0
        %v1026 = vmax.f32 %v1010, 0.0
        %v1027 = vmax.f32 %v1011, 0.0
        %v1028 = vmax.f32 %v1012, 0.0
        %v1029 = vmax.f32 %v1013, 0.0
        %v1030 = vmax.f32 %v1014, 0.0
        %v1031 = vmax.f32 %v1015, 0.0
        %v1032 = vmax.f32 %v1016, 0.0
        %v1033 = vpack.c.bf16 %v1018, %v1017
        %v1034 = vpack.c.bf16 %v1020, %v1019
        %v1035 = vpack.c.bf16 %v1022, %v1021
        %v1036 = vpack.c.bf16 %v1024, %v1023
        %v1037 = vpack.c.bf16 %v1026, %v1025
        %v1038 = vpack.c.bf16 %v1028, %v1027
        %v1039 = vpack.c.bf16 %v1030, %v1029
        %v1040 = vpack.c.bf16 %v1032, %v1031
        %v1041 = vld [vmem:[%s5] sm:$0xf]
        %v1042 = vld [vmem:[%s5 + $0x4] sm:$0xf]
        %v1043 = vld [vmem:[%s5 + $0x8] sm:$0xf]
        %v1044 = vld [vmem:[%s5 + $0xc] sm:$0xf]
        %v1045 = vld [vmem:[%s5 + $0x10] sm:$0xf]
        %v1046 = vld [vmem:[%s5 + $0x14] sm:$0xf]
        %v1047 = vld [vmem:[%s5 + $0x18] sm:$0xf]
        %v1048 = vld [vmem:[%s5 + $0x1c] sm:$0xf]
        %v1049 = vld [vmem:[%s5 + $0x20] sm:$0xf]
        %v1050 = vld [vmem:[%s5 + $0x24] sm:$0xf]
        %v1051 = vld [vmem:[%s5 + $0x28] sm:$0xf]
        %v1052 = vld [vmem:[%s5 + $0x2c] sm:$0xf]
        %v1053 = vld [vmem:[%s5 + $0x30] sm:$0xf]
        %v1054 = vld [vmem:[%s5 + $0x34] sm:$0xf]
        %v1055 = vld [vmem:[%s5 + $0x38] sm:$0xf]
        %v1056 = vld [vmem:[%s5 + $0x3c] sm:$0xf]
        %v1057 = vld [vmem:[%s6] sm:$0x1]
        %v1058 = vlaneseq
        %v1059 = vshrl.u32 %v1058, 7
        %v1060 = vsub.s32 0, %v1059
        %v1061 = vrot.slane %v1057, %v1060
        %v1078 = vunpack.c.l.b16 %v1041
        %v1079 = vunpack.c.l.b16 %v1042
        %v1080 = vunpack.c.l.b16 %v1043
        %v1081 = vunpack.c.l.b16 %v1044
        %v1082 = vunpack.c.l.b16 %v1045
        %v1083 = vunpack.c.l.b16 %v1046
        %v1084 = vunpack.c.l.b16 %v1047
        %v1085 = vunpack.c.l.b16 %v1048
        %v1086 = vunpack.c.l.b16 %v1049
        %v1087 = vunpack.c.l.b16 %v1050
        %v1088 = vunpack.c.l.b16 %v1051
        %v1089 = vunpack.c.l.b16 %v1052
        %v1090 = vunpack.c.l.b16 %v1053
        %v1091 = vunpack.c.l.b16 %v1054
        %v1092 = vunpack.c.l.b16 %v1055
        %v1093 = vunpack.c.l.b16 %v1056
        %v1094 = vpack.c.b16 %v1079, %v1078
        %v1095 = vpack.c.b16 %v1081, %v1080
        %v1096 = vpack.c.b16 %v1083, %v1082
        %v1097 = vpack.c.b16 %v1085, %v1084
        %v1098 = vpack.c.b16 %v1087, %v1086
        %v1099 = vpack.c.b16 %v1089, %v1088
        %v1100 = vpack.c.b16 %v1091, %v1090
        %v1101 = vpack.c.b16 %v1093, %v1092
        %1110 = vmatprep.subr.bf16.mxu0 0
        %1111 = vmatpush1.bf16.msra.mxu0 %v1101
        %1112 = vmatprep.subr.bf16.mxu0 0
        %1113 = vmatpush1.bf16.msra.mxu0 %v1100
        %1114 = vmatprep.subr.bf16.mxu0 0
        %1115 = vmatpush1.bf16.msra.mxu0 %v1099
        %1116 = vmatprep.subr.bf16.mxu0 0
        %1117 = vmatpush1.bf16.msra.mxu0 %v1098
        %1118 = vmatprep.subr.bf16.mxu0 0
        %1119 = vmatpush1.bf16.msra.mxu0 %v1097
        %1120 = vmatprep.subr.bf16.mxu0 0
        %1121 = vmatpush1.bf16.msra.mxu0 %v1096
        %1122 = vmatprep.subr.bf16.mxu0 0
        %1123 = vmatpush1.bf16.msra.mxu0 %v1095
        %1124 = vmatprep.subr.bf16.mxu0 0
        %1125 = vmatpush1.bf16.msra.mxu0 %v1094
        %1126 = vmatprep.subr.bf16.mxu0 0
        %1127 = vmatpush2.bf16.msra.mxu0 0
        %1128 = vmatprep.subr.bf16.mxu0 0
        %1129 = vmatpush2.bf16.msra.mxu0 0
        %1130 = vmatprep.subr.bf16.mxu0 0
        %1131 = vmatpush2.bf16.msra.mxu0 0
        %1132 = vmatprep.subr.bf16.mxu0 0
        %1133 = vmatpush2.bf16.msra.mxu0 0
        %1134 = vmatprep.subr.bf16.mxu0 0
        %1135 = vmatpush2.bf16.msra.mxu0 0
        %1136 = vmatprep.subr.bf16.mxu0 0
        %1137 = vmatpush2.bf16.msra.mxu0 0
        %1138 = vmatprep.subr.bf16.mxu0 0
        %1139 = vmatpush2.bf16.msra.mxu0 0
        %1140 = vmatprep.subr.bf16.mxu0 0
        %1141 = vmatpush2.bf16.msra.mxu0 0
        %1142 = vmatprep.mubr.bf16.mxu0 0
        %1143 = vmatmul.mubr.bf16.gmra.mxu0 %v1033
        %v1144 = vpop.f32.mrf.mxu0
        %v1145 = vadd.f32 %v1061, %v1144
        %v1146 = vpop.f32.mrf.mxu0
        %v1147 = vpop.f32.mrf.mxu0
        %v1148 = vadd.f32 %v1061, %v1147
        %v1149 = vpop.f32.mrf.mxu0
        %1150 = vmatprep.mubr.bf16.mxu0 0
        %1151 = vmatmul.mubr.bf16.gmra.mxu0 %v1034
        %v1152 = vpop.f32.mrf.mxu0
        %v1153 = vadd.f32 %v1061, %v1152
        %v1154 = vpop.f32.mrf.mxu0
        %v1155 = vpop.f32.mrf.mxu0
        %v1156 = vadd.f32 %v1061, %v1155
        %v1157 = vpop.f32.mrf.mxu0
        %1158 = vmatprep.mubr.bf16.mxu0 0
        %1159 = vmatmul.mubr.bf16.gmra.mxu0 %v1035
        %v1160 = vpop.f32.mrf.mxu0
        %v1161 = vadd.f32 %v1061, %v1160
        %v1162 = vpop.f32.mrf.mxu0
        %v1163 = vpop.f32.mrf.mxu0
        %v1164 = vadd.f32 %v1061, %v1163
        %v1165 = vpop.f32.mrf.mxu0
        %1166 = vmatprep.mubr.bf16.mxu0 0
        %1167 = vmatmul.mubr.bf16.gmra.mxu0 %v1036
        %v1168 = vpop.f32.mrf.mxu0
        %v1169 = vadd.f32 %v1061, %v1168
        %v1170 = vpop.f32.mrf.mxu0
        %v1171 = vpop.f32.mrf.mxu0
        %v1172 = vadd.f32 %v1061, %v1171
        %v1173 = vpop.f32.mrf.mxu0
        %1174 = vmatprep.mubr.bf16.mxu0 0
        %1175 = vmatmul.mubr.bf16.gmra.mxu0 %v1037
        %v1176 = vpop.f32.mrf.mxu0
        %v1177 = vadd.f32 %v1061, %v1176
        %v1178 = vpop.f32.mrf.mxu0
        %v1179 = vpop.f32.mrf.mxu0
        %v1180 = vadd.f32 %v1061, %v1179
        %v1181 = vpop.f32.mrf.mxu0
        %1182 = vmatprep.mubr.bf16.mxu0 0
        %1183 = vmatmul.mubr.bf16.gmra.mxu0 %v1038
        %v1184 = vpop.f32.mrf.mxu0
        %v1185 = vadd.f32 %v1061, %v1184
        %v1186 = vpop.f32.mrf.mxu0
        %v1187 = vpop.f32.mrf.mxu0
        %v1188 = vadd.f32 %v1061, %v1187
        %v1189 = vpop.f32.mrf.mxu0
        %1190 = vmatprep.mubr.bf16.mxu0 0
        %1191 = vmatmul.mubr.bf16.gmra.mxu0 %v1039
        %v1192 = vpop.f32.mrf.mxu0
        %v1193 = vadd.f32 %v1061, %v1192
        %v1194 = vpop.f32.mrf.mxu0
        %v1195 = vpop.f32.mrf.mxu0
        %v1196 = vadd.f32 %v1061, %v1195
        %v1197 = vpop.f32.mrf.mxu0
        %1198 = vmatprep.mubr.bf16.mxu0 0
        %1199 = vmatmul.mubr.bf16.gmra.mxu0 %v1040
        %v1200 = vpop.f32.mrf.mxu0
        %v1201 = vadd.f32 %v1061, %v1200
        %v1202 = vpop.f32.mrf.mxu0
        %v1203 = vpop.f32.mrf.mxu0
        %v1204 = vadd.f32 %v1061, %v1203
        %v1205 = vpop.f32.mrf.mxu0
        %1206 = vdwg.mxu0
        %v1207 = vld [vmem:[%s6 + $0x1] sm:$0x1]
        %v1208 = vld [vmem:[%s6 + $0x2] sm:$0x1]
        %1209 = vadd.xlane.f32.xlu0 %v1145
        %v1210 = vpop.xlane.xlu0 %1209
        %1211 = vadd.xlane.f32.xlu0 %v1148
        %v1212 = vpop.xlane.xlu0 %1211
        %1213 = vadd.xlane.f32.xlu0 %v1153
        %v1214 = vpop.xlane.xlu0 %1213
        %1215 = vadd.xlane.f32.xlu0 %v1156
        %v1216 = vpop.xlane.xlu0 %1215
        %1217 = vadd.xlane.f32.xlu0 %v1161
        %v1218 = vpop.xlane.xlu0 %1217
        %1219 = vadd.xlane.f32.xlu0 %v1164
        %v1220 = vpop.xlane.xlu0 %1219
        %1221 = vadd.xlane.f32.xlu0 %v1169
        %v1222 = vpop.xlane.xlu0 %1221
        %1223 = vadd.xlane.f32.xlu0 %v1172
        %v1224 = vpop.xlane.xlu0 %1223
        %1225 = vadd.xlane.f32.xlu0 %v1177
        %v1226 = vpop.xlane.xlu0 %1225
        %1227 = vadd.xlane.f32.xlu0 %v1180
        %v1228 = vpop.xlane.xlu0 %1227
        %1229 = vadd.xlane.f32.xlu0 %v1185
        %v1230 = vpop.xlane.xlu0 %1229
        %1231 = vadd.xlane.f32.xlu0 %v1188
        %v1232 = vpop.xlane.xlu0 %1231
        %1233 = vadd.xlane.f32.xlu0 %v1193
        %v1234 = vpop.xlane.xlu0 %1233
        %1235 = vadd.xlane.f32.xlu0 %v1196
        %v1236 = vpop.xlane.xlu0 %1235
        %1237 = vadd.xlane.f32.xlu0 %v1201
        %v1238 = vpop.xlane.xlu0 %1237
        %1239 = vadd.xlane.f32.xlu0 %v1204
        %v1240 = vpop.xlane.xlu0 %1239
        %v1241 = vmul.f32 %v1210, 0.0078125
        %v1242 = vmul.f32 %v1212, 0.0078125
        %v1243 = vmul.f32 %v1214, 0.0078125
        %v1244 = vmul.f32 %v1216, 0.0078125
        %v1245 = vmul.f32 %v1218, 0.0078125
        %v1246 = vmul.f32 %v1220, 0.0078125
        %v1247 = vmul.f32 %v1222, 0.0078125
        %v1248 = vmul.f32 %v1224, 0.0078125
        %v1249 = vmul.f32 %v1226, 0.0078125
        %v1250 = vmul.f32 %v1228, 0.0078125
        %v1251 = vmul.f32 %v1230, 0.0078125
        %v1252 = vmul.f32 %v1232, 0.0078125
        %v1253 = vmul.f32 %v1234, 0.0078125
        %v1254 = vmul.f32 %v1236, 0.0078125
        %v1255 = vmul.f32 %v1238, 0.0078125
        %v1256 = vmul.f32 %v1240, 0.0078125
        %v1257 = vmul.f32 %v1145, %v1145
        %v1258 = vmul.f32 %v1148, %v1148
        %v1259 = vmul.f32 %v1153, %v1153
        %v1260 = vmul.f32 %v1156, %v1156
        %v1261 = vmul.f32 %v1161, %v1161
        %v1262 = vmul.f32 %v1164, %v1164
        %v1263 = vmul.f32 %v1169, %v1169
        %v1264 = vmul.f32 %v1172, %v1172
        %v1265 = vmul.f32 %v1177, %v1177
        %v1266 = vmul.f32 %v1180, %v1180
        %v1267 = vmul.f32 %v1185, %v1185
        %v1268 = vmul.f32 %v1188, %v1188
        %v1269 = vmul.f32 %v1193, %v1193
        %v1270 = vmul.f32 %v1196, %v1196
        %v1271 = vmul.f32 %v1201, %v1201
        %v1272 = vmul.f32 %v1204, %v1204
        %1273 = vadd.xlane.f32.xlu0 %v1257
        %v1274 = vpop.xlane.xlu0 %1273
        %1275 = vadd.xlane.f32.xlu0 %v1258
        %v1276 = vpop.xlane.xlu0 %1275
        %1277 = vadd.xlane.f32.xlu0 %v1259
        %v1278 = vpop.xlane.xlu0 %1277
        %1279 = vadd.xlane.f32.xlu0 %v1260
        %v1280 = vpop.xlane.xlu0 %1279
        %1281 = vadd.xlane.f32.xlu0 %v1261
        %v1282 = vpop.xlane.xlu0 %1281
        %1283 = vadd.xlane.f32.xlu0 %v1262
        %v1284 = vpop.xlane.xlu0 %1283
        %1285 = vadd.xlane.f32.xlu0 %v1263
        %v1286 = vpop.xlane.xlu0 %1285
        %1287 = vadd.xlane.f32.xlu0 %v1264
        %v1288 = vpop.xlane.xlu0 %1287
        %1289 = vadd.xlane.f32.xlu0 %v1265
        %v1290 = vpop.xlane.xlu0 %1289
        %1291 = vadd.xlane.f32.xlu0 %v1266
        %v1292 = vpop.xlane.xlu0 %1291
        %1293 = vadd.xlane.f32.xlu0 %v1267
        %v1294 = vpop.xlane.xlu0 %1293
        %1295 = vadd.xlane.f32.xlu0 %v1268
        %v1296 = vpop.xlane.xlu0 %1295
        %1297 = vadd.xlane.f32.xlu0 %v1269
        %v1298 = vpop.xlane.xlu0 %1297
        %1299 = vadd.xlane.f32.xlu0 %v1270
        %v1300 = vpop.xlane.xlu0 %1299
        %1301 = vadd.xlane.f32.xlu0 %v1271
        %v1302 = vpop.xlane.xlu0 %1301
        %1303 = vadd.xlane.f32.xlu0 %v1272
        %v1304 = vpop.xlane.xlu0 %1303
        %v1305 = vmul.f32 %v1274, 0.0078125
        %v1306 = vmul.f32 %v1276, 0.0078125
        %v1307 = vmul.f32 %v1278, 0.0078125
        %v1308 = vmul.f32 %v1280, 0.0078125
        %v1309 = vmul.f32 %v1282, 0.0078125
        %v1310 = vmul.f32 %v1284, 0.0078125
        %v1311 = vmul.f32 %v1286, 0.0078125
        %v1312 = vmul.f32 %v1288, 0.0078125
        %v1313 = vmul.f32 %v1290, 0.0078125
        %v1314 = vmul.f32 %v1292, 0.0078125
        %v1315 = vmul.f32 %v1294, 0.0078125
        %v1316 = vmul.f32 %v1296, 0.0078125
        %v1317 = vmul.f32 %v1298, 0.0078125
        %v1318 = vmul.f32 %v1300, 0.0078125
        %v1319 = vmul.f32 %v1302, 0.0078125
        %v1320 = vmul.f32 %v1304, 0.0078125
        %v1321 = vmul.f32 %v1241, %v1241
        %v1322 = vmul.f32 %v1242, %v1242
        %v1323 = vmul.f32 %v1243, %v1243
        %v1324 = vmul.f32 %v1244, %v1244
        %v1325 = vmul.f32 %v1245, %v1245
        %v1326 = vmul.f32 %v1246, %v1246
        %v1327 = vmul.f32 %v1247, %v1247
        %v1328 = vmul.f32 %v1248, %v1248
        %v1329 = vmul.f32 %v1249, %v1249
        %v1330 = vmul.f32 %v1250, %v1250
        %v1331 = vmul.f32 %v1251, %v1251
        %v1332 = vmul.f32 %v1252, %v1252
        %v1333 = vmul.f32 %v1253, %v1253
        %v1334 = vmul.f32 %v1254, %v1254
        %v1335 = vmul.f32 %v1255, %v1255
        %v1336 = vmul.f32 %v1256, %v1256
        %v1337 = vsub.f32 %v1305, %v1321
        %v1338 = vsub.f32 %v1306, %v1322
        %v1339 = vsub.f32 %v1307, %v1323
        %v1340 = vsub.f32 %v1308, %v1324
        %v1341 = vsub.f32 %v1309, %v1325
        %v1342 = vsub.f32 %v1310, %v1326
        %v1343 = vsub.f32 %v1311, %v1327
        %v1344 = vsub.f32 %v1312, %v1328
        %v1345 = vsub.f32 %v1313, %v1329
        %v1346 = vsub.f32 %v1314, %v1330
        %v1347 = vsub.f32 %v1315, %v1331
        %v1348 = vsub.f32 %v1316, %v1332
        %v1349 = vsub.f32 %v1317, %v1333
        %v1350 = vsub.f32 %v1318, %v1334
        %v1351 = vsub.f32 %v1319, %v1335
        %v1352 = vsub.f32 %v1320, %v1336
        %v1353 = vmax.f32 %v1337, 0.0
        %v1354 = vmax.f32 %v1338, 0.0
        %v1355 = vmax.f32 %v1339, 0.0
        %v1356 = vmax.f32 %v1340, 0.0
        %v1357 = vmax.f32 %v1341, 0.0
        %v1358 = vmax.f32 %v1342, 0.0
        %v1359 = vmax.f32 %v1343, 0.0
        %v1360 = vmax.f32 %v1344, 0.0
        %v1361 = vmax.f32 %v1345, 0.0
        %v1362 = vmax.f32 %v1346, 0.0
        %v1363 = vmax.f32 %v1347, 0.0
        %v1364 = vmax.f32 %v1348, 0.0
        %v1365 = vmax.f32 %v1349, 0.0
        %v1366 = vmax.f32 %v1350, 0.0
        %v1367 = vmax.f32 %v1351, 0.0
        %v1368 = vmax.f32 %v1352, 0.0
        %v1369 = vsub.f32 %v1145, %v1241
        %v1370 = vsub.f32 %v1148, %v1242
        %v1371 = vsub.f32 %v1153, %v1243
        %v1372 = vsub.f32 %v1156, %v1244
        %v1373 = vsub.f32 %v1161, %v1245
        %v1374 = vsub.f32 %v1164, %v1246
        %v1375 = vsub.f32 %v1169, %v1247
        %v1376 = vsub.f32 %v1172, %v1248
        %v1377 = vsub.f32 %v1177, %v1249
        %v1378 = vsub.f32 %v1180, %v1250
        %v1379 = vsub.f32 %v1185, %v1251
        %v1380 = vsub.f32 %v1188, %v1252
        %v1381 = vsub.f32 %v1193, %v1253
        %v1382 = vsub.f32 %v1196, %v1254
        %v1383 = vsub.f32 %v1201, %v1255
        %v1384 = vsub.f32 %v1204, %v1256
        %v1385 = vadd.f32 %v1353, 1e-05
        %v1386 = vadd.f32 %v1354, 1e-05
        %v1387 = vadd.f32 %v1355, 1e-05
        %v1388 = vadd.f32 %v1356, 1e-05
        %v1389 = vadd.f32 %v1357, 1e-05
        %v1390 = vadd.f32 %v1358, 1e-05
        %v1391 = vadd.f32 %v1359, 1e-05
        %v1392 = vadd.f32 %v1360, 1e-05
        %v1393 = vadd.f32 %v1361, 1e-05
        %v1394 = vadd.f32 %v1362, 1e-05
        %v1395 = vadd.f32 %v1363, 1e-05
        %v1396 = vadd.f32 %v1364, 1e-05
        %v1397 = vadd.f32 %v1365, 1e-05
        %v1398 = vadd.f32 %v1366, 1e-05
        %v1399 = vadd.f32 %v1367, 1e-05
        %v1400 = vadd.f32 %v1368, 1e-05
        %v1401 = vrsqrt.pop %v1385
        %v1402 = vrsqrt.pop %v1386
        %v1403 = vrsqrt.pop %v1387
        %v1404 = vrsqrt.pop %v1388
        %v1405 = vrsqrt.pop %v1389
        %v1406 = vrsqrt.pop %v1390
        %v1407 = vrsqrt.pop %v1391
        %v1408 = vrsqrt.pop %v1392
        %v1409 = vrsqrt.pop %v1393
        %v1410 = vrsqrt.pop %v1394
        %v1411 = vrsqrt.pop %v1395
        %v1412 = vrsqrt.pop %v1396
        %v1413 = vrsqrt.pop %v1397
        %v1414 = vrsqrt.pop %v1398
        %v1415 = vrsqrt.pop %v1399
        %v1416 = vrsqrt.pop %v1400
        %v1417 = vmul.f32 %v1369, %v1401
        %v1418 = vmul.f32 %v1370, %v1402
        %v1419 = vmul.f32 %v1371, %v1403
        %v1420 = vmul.f32 %v1372, %v1404
        %v1421 = vmul.f32 %v1373, %v1405
        %v1422 = vmul.f32 %v1374, %v1406
        %v1423 = vmul.f32 %v1375, %v1407
        %v1424 = vmul.f32 %v1376, %v1408
        %v1425 = vmul.f32 %v1377, %v1409
        %v1426 = vmul.f32 %v1378, %v1410
        %v1427 = vmul.f32 %v1379, %v1411
        %v1428 = vmul.f32 %v1380, %v1412
        %v1429 = vmul.f32 %v1381, %v1413
        %v1430 = vmul.f32 %v1382, %v1414
        %v1431 = vmul.f32 %v1383, %v1415
        %v1432 = vmul.f32 %v1384, %v1416
        %v1433 = vlaneseq
        %v1434 = vshrl.u32 %v1433, 7
        %v1435 = vsub.s32 0, %v1434
        %v1436 = vrot.slane %v1207, %v1435
        %v1437 = vmul.f32 %v1417, %v1436
        %v1438 = vmul.f32 %v1418, %v1436
        %v1439 = vmul.f32 %v1419, %v1436
        %v1440 = vmul.f32 %v1420, %v1436
        %v1441 = vmul.f32 %v1421, %v1436
        %v1442 = vmul.f32 %v1422, %v1436
        %v1443 = vmul.f32 %v1423, %v1436
        %v1444 = vmul.f32 %v1424, %v1436
        %v1445 = vmul.f32 %v1425, %v1436
        %v1446 = vmul.f32 %v1426, %v1436
        %v1447 = vmul.f32 %v1427, %v1436
        %v1448 = vmul.f32 %v1428, %v1436
        %v1449 = vmul.f32 %v1429, %v1436
        %v1450 = vmul.f32 %v1430, %v1436
        %v1451 = vmul.f32 %v1431, %v1436
        %v1452 = vmul.f32 %v1432, %v1436
        %v1453 = vlaneseq
        %v1454 = vshrl.u32 %v1453, 7
        %v1455 = vsub.s32 0, %v1454
        %v1456 = vrot.slane %v1208, %v1455
        %v1457 = vadd.f32 %v1437, %v1456
        %v1458 = vadd.f32 %v1438, %v1456
        %v1459 = vadd.f32 %v1439, %v1456
        %v1460 = vadd.f32 %v1440, %v1456
        %v1461 = vadd.f32 %v1441, %v1456
        %v1462 = vadd.f32 %v1442, %v1456
        %v1463 = vadd.f32 %v1443, %v1456
        %v1464 = vadd.f32 %v1444, %v1456
        %v1465 = vadd.f32 %v1445, %v1456
        %v1466 = vadd.f32 %v1446, %v1456
        %v1467 = vadd.f32 %v1447, %v1456
        %v1468 = vadd.f32 %v1448, %v1456
        %v1469 = vadd.f32 %v1449, %v1456
        %v1470 = vadd.f32 %v1450, %v1456
        %v1471 = vadd.f32 %v1451, %v1456
        %v1472 = vadd.f32 %v1452, %v1456
        %v1473 = vmax.f32 %v1457, 0.0
        %v1474 = vmax.f32 %v1458, 0.0
        %v1475 = vmax.f32 %v1459, 0.0
        %v1476 = vmax.f32 %v1460, 0.0
        %v1477 = vmax.f32 %v1461, 0.0
        %v1478 = vmax.f32 %v1462, 0.0
        %v1479 = vmax.f32 %v1463, 0.0
        %v1480 = vmax.f32 %v1464, 0.0
        %v1481 = vmax.f32 %v1465, 0.0
        %v1482 = vmax.f32 %v1466, 0.0
        %v1483 = vmax.f32 %v1467, 0.0
        %v1484 = vmax.f32 %v1468, 0.0
        %v1485 = vmax.f32 %v1469, 0.0
        %v1486 = vmax.f32 %v1470, 0.0
        %v1487 = vmax.f32 %v1471, 0.0
        %v1488 = vmax.f32 %v1472, 0.0
        %v1489 = vld [vmem:[%s6 + $0x3] sm:$0x1]
        %v1490 = vld [vmem:[%s6 + $0x4] sm:$0x1]
        %1492 = vset.pattern.permute.xlu0 0
        %1493 = vperm.xlu0 %1492, %v1490
        %v1494 = vpop.permute.xlu0 %1493
        %1496 = vmatprep.subr.mxu0 0.0
        %1497 = vmatpush1.xpose.msra.mxu0 %v1488
        %1498 = vmatprep.subr.mxu0 0.0
        %1499 = vmatpush1.xpose.msra.mxu0 %v1487
        %1500 = vmatprep.subr.mxu0 0.0
        %1501 = vmatpush1.xpose.msra.mxu0 %v1486
        %1502 = vmatprep.subr.mxu0 0.0
        %1503 = vmatpush1.xpose.msra.mxu0 %v1485
        %1504 = vmatprep.subr.mxu0 0.0
        %1505 = vmatpush1.xpose.msra.mxu0 %v1484
        %1506 = vmatprep.subr.mxu0 0.0
        %1507 = vmatpush1.xpose.msra.mxu0 %v1483
        %1508 = vmatprep.subr.mxu0 0.0
        %1509 = vmatpush1.xpose.msra.mxu0 %v1482
        %1510 = vmatprep.subr.mxu0 0.0
        %1511 = vmatpush1.xpose.msra.mxu0 %v1481
        %1512 = vmatprep.subr.mxu0 0.0
        %1513 = vmatpush1.xpose.msra.mxu0 %v1480
        %1514 = vmatprep.subr.mxu0 0.0
        %1515 = vmatpush1.xpose.msra.mxu0 %v1479
        %1516 = vmatprep.subr.mxu0 0.0
        %1517 = vmatpush1.xpose.msra.mxu0 %v1478
        %1518 = vmatprep.subr.mxu0 0.0
        %1519 = vmatpush1.xpose.msra.mxu0 %v1477
        %1520 = vmatprep.subr.mxu0 0.0
        %1521 = vmatpush1.xpose.msra.mxu0 %v1476
        %1522 = vmatprep.subr.mxu0 0.0
        %1523 = vmatpush1.xpose.msra.mxu0 %v1475
        %1524 = vmatprep.subr.mxu0 0.0
        %1525 = vmatpush1.xpose.msra.mxu0 %v1474
        %1526 = vmatprep.subr.mxu0 0.0
        %1527 = vmatpush1.xpose.msra.mxu0 %v1473
        %1528 = vmatprep.subr.mxu0 0.0
        %1529 = vmatpush2.xpose.msra.mxu0 0.0
        %1530 = vmatprep.subr.mxu0 0.0
        %1531 = vmatpush2.xpose.msra.mxu0 0.0
        %1532 = vmatprep.subr.mxu0 0.0
        %1533 = vmatpush2.xpose.msra.mxu0 0.0
        %1534 = vmatprep.subr.mxu0 0.0
        %1535 = vmatpush2.xpose.msra.mxu0 0.0
        %1536 = vmatprep.subr.mxu0 0.0
        %1537 = vmatpush2.xpose.msra.mxu0 0.0
        %1538 = vmatprep.subr.mxu0 0.0
        %1539 = vmatpush2.xpose.msra.mxu0 0.0
        %1540 = vmatprep.subr.mxu0 0.0
        %1541 = vmatpush2.xpose.msra.mxu0 0.0
        %1542 = vmatprep.subr.mxu0 0.0
        %1543 = vmatpush2.xpose.msra.mxu0 0.0
        %1544 = vmatprep.subr.mxu0 0.0
        %1545 = vmatpush2.xpose.msra.mxu0 0.0
        %1546 = vmatprep.subr.mxu0 0.0
        %1547 = vmatpush2.xpose.msra.mxu0 0.0
        %1548 = vmatprep.subr.mxu0 0.0
        %1549 = vmatpush2.xpose.msra.mxu0 0.0
        %1550 = vmatprep.subr.mxu0 0.0
        %1551 = vmatpush2.xpose.msra.mxu0 0.0
        %1552 = vmatprep.subr.mxu0 0.0
        %1553 = vmatpush2.xpose.msra.mxu0 0.0
        %1554 = vmatprep.subr.mxu0 0.0
        %1555 = vmatpush2.xpose.msra.mxu0 0.0
        %1556 = vmatprep.subr.mxu0 0.0
        %1557 = vmatpush2.xpose.msra.mxu0 0.0
        %1558 = vmatprep.subr.mxu0 0.0
        %1559 = vmatpush2.xpose.msra.mxu0 0.0
        %1560 = vmatprep.mubr.f32.mxu0 0.0
        %1561 = vmatmul.mubr.f32.gmra.mxu0 %v1489
        %v1562 = vpop.f32.mrf.mxu0
        %v1563 = vadd.f32 %v1494, %v1562
        %v1564 = vpop.f32.mrf.mxu0
        %1565 = vdwg.mxu0
        %1566 = vst [vmem:[%s287] sm:$0x1] %v1563
        %s1567 = sand.u32 %s186, 1
        %s1568 = scalar_lea.sflag [#allocation3], %s1567
        %s1569 = sand.u32 %s186, 1
        %s1570 = scalar_lea.vmem [#allocation2], %s1569
        // Predicated region
        $region49: #{critic_forward.1} parent=47 // pred_check
          %p1571 = pneg %p196
        $region50: #{critic_forward.1} parent=47 // pred_check_branch
          %1573 = sbr.rel (%p1571) target = $region52
        $region51: #{critic_forward.1} parent=47 // pred_region
          %s1575 = ssub.s32 16, 16
          %1576 = vsyncadd %s1568, %s1575
          %s1577 = smul.addr %s21, 16
          %s1578 = scalar_lea.hbm %s7, %s1577
          %s1580 = sshll.u32 %s1570, 4
          %s1581 = int_to_ptr.vmem [resolvable:$true] %s1580
          %1583 = dma.vmem_to_hbm [thread:$0]  %s1581, 16, %s1578, %s1568
        $region52: #{critic_forward.1} parent=47 // pred_fallthru
          _
      $region48: #{critic_forward.1} parent=5 // pred_fallthru
        _
      %p1584 = scmp.le.s32.totalorder 2, %s16
      // Predicated region
      $region53: #{critic_forward.1} parent=5 // pred_check
        %p1585 = pneg %p1584
      $region54: #{critic_forward.1} parent=5 // pred_check_branch
        %1587 = sbr.rel (%p1585) target = $region56
      $region55: #{critic_forward.1} parent=5 // pred_region
        %s1588 = ssub.s32 %s16, 2
        // Predicated region
        $region57: #{critic_forward.1} parent=55 // pred_check
          %p1589 = pneg %p202
        $region58: #{critic_forward.1} parent=55 // pred_check_branch
          %1591 = sbr.rel (%p1589) target = $region60
        $region59: #{critic_forward.1} parent=55 // pred_region
          %s1592 = sand.u32 %s187, 1
          %s1593 = scalar_lea.sflag [#allocation3], %s1592
          %s1594 = sand.u32 %s187, 1
          %s1595 = scalar_lea.vmem [#allocation2], %s1594
          %1596 = dma.done %s1593, 16
        $region60: #{critic_forward.1} parent=55 // pred_fallthru
          _
      $region56: #{critic_forward.1} parent=5 // pred_fallthru
        _
    $region6: #{critic_forward.1} parent=1 // loop_footer
      %s20 = sadd.s32 1, %s16
    $region7: #{critic_forward.1} parent=1 // loop_footer_branch
      %15 = sbr.rel target = $region3
    $region8: #{critic_forward.1} parent=1 // loop_exit
      _
    %1597 = vsyncpa [#allocation3], 1
    %s1598 = scalar_lea.sflag [#allocation3], 1
    %1599 = vsyncpa %s1598, 1

</llo_original>
